<compile_context>
chip_gen: v5e
topology: v5e:2x2
jax: 0.10.0
libtpu: 0.0.40
codegen_flags: <defaults>
</compile_context>

<pallas_src>
import jax
import jax.numpy as jnp
from jax.experimental import pallas as pl
from jax.experimental.pallas import tpu as pltpu

LN_EPS = 1e-5


def _subgraph_kernel(x_ref, m_ref, w_ref, b_ref, g_ref, beta_ref, o_ref):
    # x_ref:    (T, S, F)   f32 -- T sequences per grid step
    # m_ref:    (T, S, 1)   f32
    # w_ref:    (F, H)      f32  (in x out layout)
    # b_ref:    (1, H)      f32
    # g_ref:    (1, H)      f32  LayerNorm gamma
    # beta_ref: (1, H)      f32  LayerNorm beta
    # o_ref:    (T, S, 2H)  f32
    T, S, F = x_ref.shape
    H = w_ref.shape[1]

    # One (T*S, F) x (F, H) matmul on the MXU, f32 accumulate (K is tiny; the
    # kernel is HBM-bound, so f32 inputs cost nothing and match the module).
    x = x_ref[...].reshape(T * S, F)
    h = jnp.dot(x, w_ref[...], preferred_element_type=jnp.float32)
    h = h + b_ref[...]                                        # (T*S, H)

    # LayerNorm over the hidden axis -- two-pass variance (numerically safe).
    mu = jnp.mean(h, axis=-1, keepdims=True)
    d = h - mu
    var = jnp.mean(d * d, axis=-1, keepdims=True)
    hn = d * jax.lax.rsqrt(var + LN_EPS)
    hn = hn * g_ref[...] + beta_ref[...]

    enc = jnp.maximum(hn, 0.0).reshape(T, S, H)               # ReLU

    # Per-sequence max-pool over S (on the un-masked encoding, as in torch).
    ag = jnp.max(enc, axis=1, keepdims=True)                  # (T, 1, H)

    # Mask the H-wide halves, then do one lane-dense 2H = 128-wide store.
    mask = m_ref[...]                                         # (T, S, 1)
    enc_m = enc * mask                                        # (T, S, H)
    ag_m = ag * mask                                          # (T, S, H) via broadcast
    o_ref[...] = jnp.concatenate([enc_m, ag_m], axis=-1).astype(o_ref.dtype)


def _choose_t(bn, s, f, h, vmem_budget=12 << 20):
    """Sequences per grid step T.

    Targets ~1024 matmul rows per step, stays within a conservative VMEM budget
    (double-buffered blocks + ~4 f32 (T*S,H) kernel intermediates), and keeps
    the grid >= 4 steps so v7x's two TensorCores each see >= 2 pipelined steps.
    """
    # Per-sequence VMEM bytes: double-buffered x/mask/out blocks + intermediates.
    per_seq = 2 * s * (f * 4 + 4 + 2 * h * 4) + 4 * s * h * 4
    t = pl.cdiv(1024, s)                              # ~1024 rows per matmul
    t = min(t, max(1, vmem_budget // per_seq))
    t = max(1, min(t, bn))
    if bn >= 4:
        t = min(t, pl.cdiv(bn, 4))                    # >= 4 grid steps
    return int(t)


def subgraph_layer(x, mask, w, b, gamma, beta):
    """x: (B, N, S, F) f32, mask: (B, N, S), w: (F, H) (in x out layout).
    Returns (B, N, S, 2*H) f32."""
    B, N, S, F = x.shape
    H = w.shape[1]
    BN = B * N

    T = _choose_t(BN, S, F, H)
    BNp = pl.cdiv(BN, T) * T

    # Pure reshapes only -- no extra HBM passes over x in the wrapper.
    x_flat = x.reshape(BN, S, F).astype(jnp.float32)
    m_flat = mask.reshape(BN, S, 1).astype(jnp.float32)
    if BNp != BN:  # only when T does not divide BN; padded rows masked/sliced off
        x_flat = jnp.pad(x_flat, ((0, BNp - BN), (0, 0), (0, 0)))
        m_flat = jnp.pad(m_flat, ((0, BNp - BN), (0, 0), (0, 0)))

    w2 = w.astype(jnp.float32)
    b2 = b.reshape(1, H).astype(jnp.float32)
    g2 = gamma.reshape(1, H).astype(jnp.float32)
    bt2 = beta.reshape(1, H).astype(jnp.float32)

    cost = pl.CostEstimate(
        flops=2 * BNp * S * F * H,
        transcendentals=BNp * S,                             # rsqrt per row
        bytes_accessed=BNp * S * (F * 4 + 4 + 2 * H * 4) + (F * H + 3 * H) * 4,
    )

    out = pl.pallas_call(
        _subgraph_kernel,
        out_shape=jax.ShapeDtypeStruct((BNp, S, 2 * H), jnp.float32),
        grid_spec=pltpu.PrefetchScalarGridSpec(
            num_scalar_prefetch=0,
            grid=(BNp // T,),
            in_specs=[
                pl.BlockSpec((T, S, F), lambda i: (i, 0, 0)),
                pl.BlockSpec((T, S, 1), lambda i: (i, 0, 0)),
                pl.BlockSpec((F, H), lambda i: (0, 0)),
                pl.BlockSpec((1, H), lambda i: (0, 0)),
                pl.BlockSpec((1, H), lambda i: (0, 0)),
                pl.BlockSpec((1, H), lambda i: (0, 0)),
            ],
            out_specs=pl.BlockSpec((T, S, 2 * H), lambda i: (i, 0, 0)),
        ),
        compiler_params=pltpu.CompilerParams(
            dimension_semantics=("parallel",),
            vmem_limit_bytes=32 * 1024 * 1024,
        ),
        cost_estimate=cost,
    )(x_flat, m_flat, w2, b2, g2, bt2)

    return out[:BN].reshape(B, N, S, 2 * H)


def reference_f32(x, mask, w, b, gamma, beta):
    """Pure-f32 JAX reference mirroring the PyTorch forward."""
    h = jnp.einsum("bnsf,fh->bnsh", x, w) + b
    mu = jnp.mean(h, axis=-1, keepdims=True)
    var = jnp.mean((h - mu) ** 2, axis=-1, keepdims=True)
    hn = (h - mu) / jnp.sqrt(var + LN_EPS) * gamma + beta
    enc = jnp.maximum(hn, 0.0)
    ag = jnp.max(enc, axis=2, keepdims=True)
    out = jnp.concatenate([enc, jnp.broadcast_to(ag, enc.shape)], axis=-1)
    return out * mask[..., None]


if __name__ == "__main__":
    key = jax.random.PRNGKey(0)
    B, N, S, F, H = 2, 32, 16, 7, 64   # BN=64 -> T=16, grid=(4,), M=T*S=256

    k1, k2, k3, k4 = jax.random.split(key, 4)
    x = jax.random.normal(k1, (B, N, S, F), dtype=jnp.float32)
    mask = (jax.random.uniform(k2, (B, N, S)) > 0.3).astype(jnp.float32)

    # Deterministic parameter init (nn.Linear-like uniform, LayerNorm ones/zeros).
    limit = 1.0 / jnp.sqrt(jnp.float32(F))
    w = jax.random.uniform(k3, (F, H), minval=-limit, maxval=limit,
                           dtype=jnp.float32)      # (in, out) layout
    b = jax.random.uniform(k4, (H,), minval=-limit, maxval=limit,
                           dtype=jnp.float32)
    gamma = jnp.ones((H,), jnp.float32)
    beta = jnp.zeros((H,), jnp.float32)

    out = jax.block_until_ready(subgraph_layer(x, mask, w, b, gamma, beta))
    assert out.shape == (B, N, S, 2 * H)

    # All-f32 kernel now matches the module reference tightly.
    ref = reference_f32(x, mask, w, b, gamma, beta)
    max_err = float(jnp.max(jnp.abs(out - ref)))
    assert jnp.allclose(out, ref, atol=1e-3, rtol=1e-3), \
        f"mismatch vs f32 reference (max abs err {max_err})"

    print("KERNEL_OK")
</pallas_src>

<mosaic_0001>
module attributes {stable_mosaic.version = 11 : i64} {
  func.func @_subgraph_kernel(%arg0: i32, %arg1: memref<16x16x7xf32, #tpu.memory_space<vmem>>, %arg2: memref<16x16x1xf32, #tpu.memory_space<vmem>>, %arg3: memref<7x64xf32, #tpu.memory_space<vmem>>, %arg4: memref<1x64xf32, #tpu.memory_space<vmem>>, %arg5: memref<1x64xf32, #tpu.memory_space<vmem>>, %arg6: memref<1x64xf32, #tpu.memory_space<vmem>>, %arg7: memref<16x16x128xf32, #tpu.memory_space<vmem>>) attributes {dimension_semantics = [#tpu.dimension_semantics<parallel>], iteration_bounds = array<i64: 4>, scalar_prefetch = 0 : i64, scratch_operands = 0 : i64, tpu.core_type = #tpu.core_type<tc>, window_params = [{transform_indices = @transform_0, window_bounds = array<i64: 16, 16, 7>}, {transform_indices = @transform_1, window_bounds = array<i64: 16, 16, 1>}, {pipeline_mode = #tpu.pipeline_mode<synchronous>, transform_indices = @transform_2, window_bounds = array<i64: 7, 64>}, {pipeline_mode = #tpu.pipeline_mode<synchronous>, transform_indices = @transform_3, window_bounds = array<i64: 1, 64>}, {pipeline_mode = #tpu.pipeline_mode<synchronous>, transform_indices = @transform_4, window_bounds = array<i64: 1, 64>}, {pipeline_mode = #tpu.pipeline_mode<synchronous>, transform_indices = @transform_5, window_bounds = array<i64: 1, 64>}, {transform_indices = @transform_6, window_bounds = array<i64: 16, 16, 128>}]} {
    %c0 = arith.constant 0 : index
    %c0_0 = arith.constant 0 : index
    %c0_1 = arith.constant 0 : index
    %0 = vector.load %arg1[%c0, %c0_0, %c0_1] : memref<16x16x7xf32, #tpu.memory_space<vmem>>, vector<16x16x7xf32>
    %1 = vector.shape_cast %0 : vector<16x16x7xf32> to vector<256x7xf32>
    %c0_2 = arith.constant 0 : index
    %c0_3 = arith.constant 0 : index
    %2 = vector.load %arg3[%c0_2, %c0_3] : memref<7x64xf32, #tpu.memory_space<vmem>>, vector<7x64xf32>
    %cst = arith.constant dense<0.000000e+00> : vector<256x64xf32>
    %3 = tpu.matmul %1, %2, %cst {dimension_numbers = #tpu.dot_dimension_numbers<[1], [0], [0], [1], [0, 0, 1, 1], [], []>} : vector<256x7xf32>, vector<7x64xf32>, vector<256x64xf32> -> vector<256x64xf32>
    %c0_4 = arith.constant 0 : index
    %c0_5 = arith.constant 0 : index
    %4 = vector.load %arg4[%c0_4, %c0_5] : memref<1x64xf32, #tpu.memory_space<vmem>>, vector<1x64xf32>
    %5 = vector.broadcast %4 : vector<1x64xf32> to vector<256x64xf32>
    %6 = arith.addf %3, %5 : vector<256x64xf32>
    %cst_6 = arith.constant dense<0.000000e+00> : vector<256xf32>
    %7 = vector.multi_reduction <add>, %6, %cst_6 [1] : vector<256x64xf32> to vector<256xf32>
    %8 = vector.shape_cast %7 : vector<256xf32> to vector<256x1xf32>
    %cst_7 = arith.constant 6.400000e+01 : f32
    %9 = vector.broadcast %cst_7 : f32 to vector<256x1xf32>
    %10 = arith.divf %8, %9 : vector<256x1xf32>
    %11 = vector.broadcast %10 : vector<256x1xf32> to vector<256x64xf32>
    %12 = arith.subf %6, %11 : vector<256x64xf32>
    %13 = arith.mulf %12, %12 : vector<256x64xf32>
    %cst_8 = arith.constant dense<0.000000e+00> : vector<256xf32>
    %14 = vector.multi_reduction <add>, %13, %cst_8 [1] : vector<256x64xf32> to vector<256xf32>
    %15 = vector.shape_cast %14 : vector<256xf32> to vector<256x1xf32>
    %cst_9 = arith.constant 6.400000e+01 : f32
    %16 = vector.broadcast %cst_9 : f32 to vector<256x1xf32>
    %17 = arith.divf %15, %16 : vector<256x1xf32>
    %cst_10 = arith.constant 9.99999974E-6 : f32
    %18 = vector.broadcast %cst_10 : f32 to vector<256x1xf32>
    %19 = arith.addf %17, %18 : vector<256x1xf32>
    %20 = math.rsqrt %19 : vector<256x1xf32>
    %21 = vector.broadcast %20 : vector<256x1xf32> to vector<256x64xf32>
    %22 = arith.mulf %12, %21 : vector<256x64xf32>
    %c0_11 = arith.constant 0 : index
    %c0_12 = arith.constant 0 : index
    %23 = vector.load %arg5[%c0_11, %c0_12] : memref<1x64xf32, #tpu.memory_space<vmem>>, vector<1x64xf32>
    %24 = vector.broadcast %23 : vector<1x64xf32> to vector<256x64xf32>
    %25 = arith.mulf %22, %24 : vector<256x64xf32>
    %c0_13 = arith.constant 0 : index
    %c0_14 = arith.constant 0 : index
    %26 = vector.load %arg6[%c0_13, %c0_14] : memref<1x64xf32, #tpu.memory_space<vmem>>, vector<1x64xf32>
    %27 = vector.broadcast %26 : vector<1x64xf32> to vector<256x64xf32>
    %28 = arith.addf %25, %27 : vector<256x64xf32>
    %cst_15 = arith.constant 0.000000e+00 : f32
    %29 = vector.broadcast %cst_15 : f32 to vector<256x64xf32>
    %30 = arith.maximumf %28, %29 : vector<256x64xf32>
    %31 = vector.shape_cast %30 : vector<256x64xf32> to vector<16x16x64xf32>
    %cst_16 = arith.constant dense<0xFF800000> : vector<16x64xf32>
    %32 = vector.multi_reduction <maximumf>, %31, %cst_16 [1] : vector<16x16x64xf32> to vector<16x64xf32>
    %33 = vector.shape_cast %32 : vector<16x64xf32> to vector<16x1x64xf32>
    %c0_17 = arith.constant 0 : index
    %c0_18 = arith.constant 0 : index
    %c0_19 = arith.constant 0 : index
    %34 = vector.load %arg2[%c0_17, %c0_18, %c0_19] : memref<16x16x1xf32, #tpu.memory_space<vmem>>, vector<16x16x1xf32>
    %35 = vector.broadcast %34 : vector<16x16x1xf32> to vector<16x16x64xf32>
    %36 = arith.mulf %31, %35 : vector<16x16x64xf32>
    %37 = vector.broadcast %33 : vector<16x1x64xf32> to vector<16x16x64xf32>
    %38 = vector.broadcast %34 : vector<16x16x1xf32> to vector<16x16x64xf32>
    %39 = arith.mulf %37, %38 : vector<16x16x64xf32>
    %40 = tpu.concatenate %36, %39 in 2 : vector<16x16x64xf32>, vector<16x16x64xf32> -> vector<16x16x128xf32>
    %c0_20 = arith.constant 0 : index
    %c0_21 = arith.constant 0 : index
    %c0_22 = arith.constant 0 : index
    %41 = vector.load %arg7[%c0_20, %c0_21, %c0_22] : memref<16x16x128xf32, #tpu.memory_space<vmem>>, vector<16x16x128xf32>
    tpu.vector_store %arg7[%c0_20, %c0_21, %c0_22], %40 {strides = array<i32>} : memref<16x16x128xf32, #tpu.memory_space<vmem>>, vector<16x16x128xf32>,
    return
  }
  func.func @transform_0(%arg0: i32) -> (i32, i32, i32) {
    %c0_i32 = arith.constant 0 : i32
    %c0_i32_0 = arith.constant 0 : i32
    %c0_i32_1 = arith.constant 0 : i32
    return %arg0, %c0_i32, %c0_i32_0 : i32, i32, i32
  }
  func.func @transform_1(%arg0: i32) -> (i32, i32, i32) {
    %c0_i32 = arith.constant 0 : i32
    %c0_i32_0 = arith.constant 0 : i32
    %c0_i32_1 = arith.constant 0 : i32
    return %arg0, %c0_i32, %c0_i32_0 : i32, i32, i32
  }
  func.func @transform_2(%arg0: i32) -> (i32, i32) {
    %c0_i32 = arith.constant 0 : i32
    %c0_i32_0 = arith.constant 0 : i32
    %c0_i32_1 = arith.constant 0 : i32
    return %c0_i32, %c0_i32_0 : i32, i32
  }
  func.func @transform_3(%arg0: i32) -> (i32, i32) {
    %c0_i32 = arith.constant 0 : i32
    %c0_i32_0 = arith.constant 0 : i32
    %c0_i32_1 = arith.constant 0 : i32
    return %c0_i32, %c0_i32_0 : i32, i32
  }
  func.func @transform_4(%arg0: i32) -> (i32, i32) {
    %c0_i32 = arith.constant 0 : i32
    %c0_i32_0 = arith.constant 0 : i32
    %c0_i32_1 = arith.constant 0 : i32
    return %c0_i32, %c0_i32_0 : i32, i32
  }
  func.func @transform_5(%arg0: i32) -> (i32, i32) {
    %c0_i32 = arith.constant 0 : i32
    %c0_i32_0 = arith.constant 0 : i32
    %c0_i32_1 = arith.constant 0 : i32
    return %c0_i32, %c0_i32_0 : i32, i32
  }
  func.func @transform_6(%arg0: i32) -> (i32, i32, i32) {
    %c0_i32 = arith.constant 0 : i32
    %c0_i32_0 = arith.constant 0 : i32
    %c0_i32_1 = arith.constant 0 : i32
    return %arg0, %c0_i32, %c0_i32_0 : i32, i32, i32
  }
}

</mosaic_0001>

<llo_original>
// kernel: tpu_custom_call.1
$region0: #{tpu_custom_call.1}
  #allocation0 [shape = 'u32[]', space=smem, size = 0x4, offset = 0x4, fixed_abs, tag = 'smem constant byte address 0x4 - core index']
  #allocation1 [shape = 'u32[72,128]{1,0:T(1,128)}', space=vmem, size = 0x9000, scoped, tag = 'internal scratch']
  %s0 = inlined_call_operand.vmem [shape: f32[64,16,7], index: 0, kind: input, shape index: {}]
  %s1 = inlined_call_operand.vmem [shape: f32[64,16,1], index: 1, kind: input, shape index: {}]
  %s2 = inlined_call_operand.vmem [shape: f32[7,64], index: 2, kind: input, shape index: {}]
  %s3 = inlined_call_operand.vmem [shape: f32[1,64], index: 3, kind: input, shape index: {}]
  %s4 = inlined_call_operand.vmem [shape: f32[1,64], index: 4, kind: input, shape index: {}]
  %s5 = inlined_call_operand.vmem [shape: f32[1,64], index: 5, kind: input, shape index: {}]
  %s6 = inlined_call_operand.hbm [shape: f32[64,16,128], index: 6, kind: output, shape index: {}]
  %s7 = sld [smem:[#allocation0]]
  $region57: #{tpu_custom_call.1} parent=0
    _
  %s9 = ssub.s32 1, %s7
  %s10 = scalar_select 0, %s9, %s7
  $region1: #{tpu_custom_call.1} parent=0
    #allocation2 [shape = 'u8[262144]{0}', space=vmem, size = 0x40000, scoped, tag = 'output window, operand 0']
    #allocation3 [shape = 's32[2]{0}', space=sflag, size = 0x8, scoped, tag = 'scoped memory for tpu_custom_call.1']
    %11 = vsyncpa [#allocation3], 0
    %s12 = scalar_lea.sflag [#allocation3], 1
    %13 = vsyncpa %s12, 0
    loop: start=0, step=1, limit=6
    $region2: #{tpu_custom_call.1} parent=1 // loop_pre_header
      _
    $region3: #{tpu_custom_call.1} parent=1 // loop_header
      %s15 = sphi 0, %s19
      %p16 = scmp.ge.s32.totalorder %s15, 6
      %s25 = sphi 0, %s27
      %s28 = sphi 0, %s25
      %s29 = sphi 0, %s28
      %s45 = sphi 0, %s29
      %s51 = sphi 0, %s53
      %s54 = sphi 0, %s51
      %s55 = sphi 0, %s54
      %s71 = sphi 0, %s55
      %s75 = sphi 0, %s75
      %s77 = sphi 0, %s75
      %s78 = sphi 0, %s77
      %s92 = sphi 0, %s78
      %s96 = sphi 0, %s96
      %s98 = sphi 0, %s96
      %s99 = sphi 0, %s98
      %s113 = sphi 0, %s99
      %s117 = sphi 0, %s117
      %s119 = sphi 0, %s117
      %s120 = sphi 0, %s119
      %s134 = sphi 0, %s120
      %s138 = sphi 0, %s138
      %s140 = sphi 0, %s138
      %s141 = sphi 0, %s140
      %s155 = sphi 0, %s141
      %s161 = sphi 0, %s163
      %s164 = sphi 0, %s161
      %s165 = sphi 0, %s164
      %s181 = sphi 0, %s165
    $region4: #{tpu_custom_call.1} parent=1 // loop_header_branch
      %18 = sbr.rel (%p16) target = $region8
    $region5: #{tpu_custom_call.1} parent=1 // loop_body
      %s20 = ssub.s32 %s15, 1
      %s21 = ssub.s32 %s15, 2
      %s22 = sadd.s32 %s15, 1
      %s23 = ssub.s32 %s15, %s22
      %p24 = scmp.eq.s32.totalorder %s23, 0
      %s26 = sadd.s32 %s25, 1
      %s27 = scalar_select %p24, %s25, %s26
      %p30 = pneg %p24
      %p31 = scmp.eq.s32.totalorder %s15, 3
      %p32 = por %p30, %p31
      %p33 = scmp.ne.s32.totalorder %s25, %s28
      %p34 = scmp.eq.s32.totalorder %s15, 0
      %p35 = por %p33, %p34
      %p36 = scmp.ne.s32.totalorder %s25, %s28
      %p37 = scmp.eq.s32.totalorder %s20, 3
      %p38 = por %p36, %p37
      %p39 = scmp.ne.s32.totalorder %s28, %s29
      %p40 = scmp.eq.s32.totalorder %s20, 0
      %p41 = por %p39, %p40
      %p42 = scmp.ne.s32.totalorder %s28, %s29
      %p43 = scmp.eq.s32.totalorder %s21, 3
      %p44 = por %p42, %p43
      %p46 = scmp.ne.s32.totalorder %s29, %s45
      %p47 = scmp.eq.s32.totalorder %s21, 0
      %p48 = por %p46, %p47
      %s49 = ssub.s32 %s15, %s22
      %p50 = scmp.eq.s32.totalorder %s49, 0
      %s52 = sadd.s32 %s51, 1
      %s53 = scalar_select %p50, %s51, %s52
      %p56 = pneg %p50
      %p57 = scmp.eq.s32.totalorder %s15, 3
      %p58 = por %p56, %p57
      %p59 = scmp.ne.s32.totalorder %s51, %s54
      %p60 = scmp.eq.s32.totalorder %s15, 0
      %p61 = por %p59, %p60
      %p62 = scmp.ne.s32.totalorder %s51, %s54
      %p63 = scmp.eq.s32.totalorder %s20, 3
      %p64 = por %p62, %p63
      %p65 = scmp.ne.s32.totalorder %s54, %s55
      %p66 = scmp.eq.s32.totalorder %s20, 0
      %p67 = por %p65, %p66
      %p68 = scmp.ne.s32.totalorder %s54, %s55
      %p69 = scmp.eq.s32.totalorder %s21, 3
      %p70 = por %p68, %p69
      %p72 = scmp.ne.s32.totalorder %s55, %s71
      %p73 = scmp.eq.s32.totalorder %s21, 0
      %p74 = por %p72, %p73
      %s76 = sadd.s32 %s75, 1
      %p79 = scmp.eq.s32.totalorder %s15, 3
      %p80 = scmp.ne.s32.totalorder %s75, %s77
      %p81 = scmp.eq.s32.totalorder %s15, 0
      %p82 = por %p80, %p81
      %p83 = scmp.ne.s32.totalorder %s75, %s77
      %p84 = scmp.eq.s32.totalorder %s20, 3
      %p85 = por %p83, %p84
      %p86 = scmp.ne.s32.totalorder %s77, %s78
      %p87 = scmp.eq.s32.totalorder %s20, 0
      %p88 = por %p86, %p87
      %p89 = scmp.ne.s32.totalorder %s77, %s78
      %p90 = scmp.eq.s32.totalorder %s21, 3
      %p91 = por %p89, %p90
      %p93 = scmp.ne.s32.totalorder %s78, %s92
      %p94 = scmp.eq.s32.totalorder %s21, 0
      %p95 = por %p93, %p94
      %s97 = sadd.s32 %s96, 1
      %p100 = scmp.eq.s32.totalorder %s15, 3
      %p101 = scmp.ne.s32.totalorder %s96, %s98
      %p102 = scmp.eq.s32.totalorder %s15, 0
      %p103 = por %p101, %p102
      %p104 = scmp.ne.s32.totalorder %s96, %s98
      %p105 = scmp.eq.s32.totalorder %s20, 3
      %p106 = por %p104, %p105
      %p107 = scmp.ne.s32.totalorder %s98, %s99
      %p108 = scmp.eq.s32.totalorder %s20, 0
      %p109 = por %p107, %p108
      %p110 = scmp.ne.s32.totalorder %s98, %s99
      %p111 = scmp.eq.s32.totalorder %s21, 3
      %p112 = por %p110, %p111
      %p114 = scmp.ne.s32.totalorder %s99, %s113
      %p115 = scmp.eq.s32.totalorder %s21, 0
      %p116 = por %p114, %p115
      %s118 = sadd.s32 %s117, 1
      %p121 = scmp.eq.s32.totalorder %s15, 3
      %p122 = scmp.ne.s32.totalorder %s117, %s119
      %p123 = scmp.eq.s32.totalorder %s15, 0
      %p124 = por %p122, %p123
      %p125 = scmp.ne.s32.totalorder %s117, %s119
      %p126 = scmp.eq.s32.totalorder %s20, 3
      %p127 = por %p125, %p126
      %p128 = scmp.ne.s32.totalorder %s119, %s120
      %p129 = scmp.eq.s32.totalorder %s20, 0
      %p130 = por %p128, %p129
      %p131 = scmp.ne.s32.totalorder %s119, %s120
      %p132 = scmp.eq.s32.totalorder %s21, 3
      %p133 = por %p131, %p132
      %p135 = scmp.ne.s32.totalorder %s120, %s134
      %p136 = scmp.eq.s32.totalorder %s21, 0
      %p137 = por %p135, %p136
      %s139 = sadd.s32 %s138, 1
      %p142 = scmp.eq.s32.totalorder %s15, 3
      %p143 = scmp.ne.s32.totalorder %s138, %s140
      %p144 = scmp.eq.s32.totalorder %s15, 0
      %p145 = por %p143, %p144
      %p146 = scmp.ne.s32.totalorder %s138, %s140
      %p147 = scmp.eq.s32.totalorder %s20, 3
      %p148 = por %p146, %p147
      %p149 = scmp.ne.s32.totalorder %s140, %s141
      %p150 = scmp.eq.s32.totalorder %s20, 0
      %p151 = por %p149, %p150
      %p152 = scmp.ne.s32.totalorder %s140, %s141
      %p153 = scmp.eq.s32.totalorder %s21, 3
      %p154 = por %p152, %p153
      %p156 = scmp.ne.s32.totalorder %s141, %s155
      %p157 = scmp.eq.s32.totalorder %s21, 0
      %p158 = por %p156, %p157
      %s159 = ssub.s32 %s15, %s22
      %p160 = scmp.eq.s32.totalorder %s159, 0
      %s162 = sadd.s32 %s161, 1
      %s163 = scalar_select %p160, %s161, %s162
      %p166 = pneg %p160
      %p167 = scmp.eq.s32.totalorder %s15, 3
      %p168 = por %p166, %p167
      %p169 = scmp.ne.s32.totalorder %s161, %s164
      %p170 = scmp.eq.s32.totalorder %s15, 0
      %p171 = por %p169, %p170
      %p172 = scmp.ne.s32.totalorder %s161, %s164
      %p173 = scmp.eq.s32.totalorder %s20, 3
      %p174 = por %p172, %p173
      %p175 = scmp.ne.s32.totalorder %s164, %s165
      %p176 = scmp.eq.s32.totalorder %s20, 0
      %p177 = por %p175, %p176
      %p178 = scmp.ne.s32.totalorder %s164, %s165
      %p179 = scmp.eq.s32.totalorder %s21, 3
      %p180 = por %p178, %p179
      %p182 = scmp.ne.s32.totalorder %s165, %s181
      %p183 = scmp.eq.s32.totalorder %s21, 0
      %p184 = por %p182, %p183
      %p185 = scmp.le.s32.totalorder 1, %s15
      %p186 = scmp.lt.s32.totalorder %s15, 5
      %p187 = pnand %p185, %p186
      %p188 = pneg %p187
      // Predicated region
      $region9: #{tpu_custom_call.1} parent=5 // pred_check
        _
      $region10: #{tpu_custom_call.1} parent=5 // pred_check_branch
        %190 = sbr.rel (%p187) target = $region12
      $region11: #{tpu_custom_call.1} parent=5 // pred_region
        %s191 = ssub.s32 %s15, 1
        // Predicated region
        $region13: #{tpu_custom_call.1} parent=11 // pred_check
          %p192 = pneg %p88
        $region14: #{tpu_custom_call.1} parent=11 // pred_check_branch
          %194 = sbr.rel (%p192) target = $region16
        $region15: #{tpu_custom_call.1} parent=11 // pred_region
          _
        $region16: #{tpu_custom_call.1} parent=11 // pred_fallthru
          _
        // Predicated region
        $region17: #{tpu_custom_call.1} parent=11 // pred_check
          %p195 = pneg %p109
        $region18: #{tpu_custom_call.1} parent=11 // pred_check_branch
          %197 = sbr.rel (%p195) target = $region20
        $region19: #{tpu_custom_call.1} parent=11 // pred_region
          _
        $region20: #{tpu_custom_call.1} parent=11 // pred_fallthru
          _
        // Predicated region
        $region21: #{tpu_custom_call.1} parent=11 // pred_check
          %p198 = pneg %p130
        $region22: #{tpu_custom_call.1} parent=11 // pred_check_branch
          %200 = sbr.rel (%p198) target = $region24
        $region23: #{tpu_custom_call.1} parent=11 // pred_region
          _
        $region24: #{tpu_custom_call.1} parent=11 // pred_fallthru
          _
        // Predicated region
        $region25: #{tpu_custom_call.1} parent=11 // pred_check
          %p201 = pneg %p151
        $region26: #{tpu_custom_call.1} parent=11 // pred_check_branch
          %203 = sbr.rel (%p201) target = $region28
        $region27: #{tpu_custom_call.1} parent=11 // pred_region
          _
        $region28: #{tpu_custom_call.1} parent=11 // pred_fallthru
          _
      $region12: #{tpu_custom_call.1} parent=5 // pred_fallthru
        _
      %p204 = scmp.lt.s32.totalorder %s15, 4
      // Predicated region
      $region29: #{tpu_custom_call.1} parent=5 // pred_check
        %p205 = pneg %p204
      $region30: #{tpu_custom_call.1} parent=5 // pred_check_branch
        %207 = sbr.rel (%p205) target = $region32
      $region31: #{tpu_custom_call.1} parent=5 // pred_region
        // Predicated region
        $region33: #{tpu_custom_call.1} parent=31 // pred_check
          %p208 = pneg %p35
        $region34: #{tpu_custom_call.1} parent=31 // pred_check_branch
          %210 = sbr.rel (%p208) target = $region36
        $region35: #{tpu_custom_call.1} parent=31 // pred_region
          %s211 = smul.u32 16, %s15
          %p212 = scmp.lt.s32.totalorder %s211, 63
          %s213 = scalar_select %p212, %s211, 63
          %s214 = smul.addr %s213, 2
          %s215 = smul.addr %s214, 8
          %s216 = scalar_lea.vmem %s0, %s215
          %s217 = smul.u32 16, %s15
        $region36: #{tpu_custom_call.1} parent=31 // pred_fallthru
          _
        // Predicated region
        $region37: #{tpu_custom_call.1} parent=31 // pred_check
          %p218 = pneg %p61
        $region38: #{tpu_custom_call.1} parent=31 // pred_check_branch
          %220 = sbr.rel (%p218) target = $region40
        $region39: #{tpu_custom_call.1} parent=31 // pred_region
          %s221 = smul.u32 16, %s15
          %p222 = scmp.lt.s32.totalorder %s221, 63
          %s223 = scalar_select %p222, %s221, 63
          %s224 = smul.addr %s223, 2
          %s225 = smul.addr %s224, 8
          %s226 = scalar_lea.vmem %s1, %s225
          %s227 = smul.u32 16, %s15
        $region40: #{tpu_custom_call.1} parent=31 // pred_fallthru
          _
      $region32: #{tpu_custom_call.1} parent=5 // pred_fallthru
        _
      %p228 = scmp.le.s32.totalorder 1, %s15
      %p229 = scmp.lt.s32.totalorder %s15, 5
      %p230 = pnand %p228, %p229
      %p231 = pneg %p230
      // Predicated region
      $region41: #{tpu_custom_call.1} parent=5 // pred_check
        _
      $region42: #{tpu_custom_call.1} parent=5 // pred_check_branch
        %233 = sbr.rel (%p230) target = $region44
      $region43: #{tpu_custom_call.1} parent=5 // pred_region
        %s234 = ssub.s32 %s15, 1
        %s235 = smul.u32 16, %s20
        %p236 = scmp.lt.s32.totalorder %s235, 63
        %s237 = scalar_select %p236, %s235, 63
        %s238 = smul.addr %s237, 2
        %s239 = smul.addr %s238, 8
        %s240 = scalar_lea.vmem %s0, %s239
        %p241 = pneg %p41
        %p242 = pneg %p38
        %s243 = smul.u32 16, %s20
        %p244 = scmp.lt.s32.totalorder %s243, 63
        %s245 = scalar_select %p244, %s243, 63
        %s246 = smul.addr %s245, 2
        %s247 = smul.addr %s246, 8
        %s248 = scalar_lea.vmem %s1, %s247
        %p249 = pneg %p67
        %p250 = pneg %p64
        %p251 = pneg %p88
        %p252 = pneg %p85
        %p253 = pneg %p109
        %p254 = pneg %p106
        %p255 = pneg %p130
        %p256 = pneg %p127
        %p257 = pneg %p151
        %p258 = pneg %p148
        %p259 = pneg %p177
        %p260 = pneg %p174
        %s261 = sand.u32 %s164, 1
        %s262 = scalar_lea.sflag [#allocation3], %s261
        %s263 = sand.u32 %s164, 1
        %s264 = smul.addr %s263, 256
        %s265 = scalar_lea.vmem [#allocation2], %s264
        %s266 = smul.u32 16, %s20
        %p267 = scmp.lt.s32.totalorder %s266, 63
        %s268 = scalar_select %p267, %s266, 63
        %s269 = smul.addr %s268, 2
        %s270 = smul.addr %s269, 8
        %s271 = scalar_lea.vmem %s0, %s270
        %s272 = smul.u32 16, %s20
        %s273 = smul.u32 16, %s20
        %p274 = scmp.lt.s32.totalorder %s273, 63
        %s275 = scalar_select %p274, %s273, 63
        %s276 = smul.addr %s275, 2
        %s277 = smul.addr %s276, 8
        %s278 = scalar_lea.vmem %s1, %s277
        %s279 = smul.u32 16, %s20
        %s280 = smul.u32 16, %s20
        %v281 = vld [vmem:[%s271] sm:$0xff]
        %v282 = vld [vmem:[%s271 + $0x8] sm:$0xff]
        %v283 = vld [vmem:[%s271 + $0x10] sm:$0xff]
        %v284 = vld [vmem:[%s271 + $0x18] sm:$0xff]
        %v285 = vld [vmem:[%s271 + $0x20] sm:$0xff]
        %v286 = vld [vmem:[%s271 + $0x28] sm:$0xff]
        %v287 = vld [vmem:[%s271 + $0x30] sm:$0xff]
        %v288 = vld [vmem:[%s271 + $0x38] sm:$0xff]
        %v289 = vld [vmem:[%s271 + $0x40] sm:$0xff]
        %v290 = vld [vmem:[%s271 + $0x48] sm:$0xff]
        %v291 = vld [vmem:[%s271 + $0x50] sm:$0xff]
        %v292 = vld [vmem:[%s271 + $0x58] sm:$0xff]
        %v293 = vld [vmem:[%s271 + $0x60] sm:$0xff]
        %v294 = vld [vmem:[%s271 + $0x68] sm:$0xff]
        %v295 = vld [vmem:[%s271 + $0x70] sm:$0xff]
        %v296 = vld [vmem:[%s271 + $0x78] sm:$0xff]
        %v297 = vld [vmem:[%s271 + $0x80] sm:$0xff]
        %v298 = vld [vmem:[%s271 + $0x88] sm:$0xff]
        %v299 = vld [vmem:[%s271 + $0x90] sm:$0xff]
        %v300 = vld [vmem:[%s271 + $0x98] sm:$0xff]
        %v301 = vld [vmem:[%s271 + $0xa0] sm:$0xff]
        %v302 = vld [vmem:[%s271 + $0xa8] sm:$0xff]
        %v303 = vld [vmem:[%s271 + $0xb0] sm:$0xff]
        %v304 = vld [vmem:[%s271 + $0xb8] sm:$0xff]
        %v305 = vld [vmem:[%s271 + $0xc0] sm:$0xff]
        %v306 = vld [vmem:[%s271 + $0xc8] sm:$0xff]
        %v307 = vld [vmem:[%s271 + $0xd0] sm:$0xff]
        %v308 = vld [vmem:[%s271 + $0xd8] sm:$0xff]
        %v309 = vld [vmem:[%s271 + $0xe0] sm:$0xff]
        %v310 = vld [vmem:[%s271 + $0xe8] sm:$0xff]
        %v311 = vld [vmem:[%s271 + $0xf0] sm:$0xff]
        %v312 = vld [vmem:[%s271 + $0xf8] sm:$0xff]
        %v313 = vld [vmem:[%s2] sm:$0x7f]
        %v314 = vld [vmem:[%s3] sm:$0x1]
        %v316 = vperm.slane %v314, 0
        %vm318 = vcmask 56320
        %v320 = vsel %vm318, %v281, 0
        %v323 = vsel %vm318, %v282, 0
        %v326 = vsel %vm318, %v283, 0
        %v329 = vsel %vm318, %v284, 0
        %v332 = vsel %vm318, %v285, 0
        %v335 = vsel %vm318, %v286, 0
        %v338 = vsel %vm318, %v287, 0
        %v341 = vsel %vm318, %v288, 0
        %v344 = vsel %vm318, %v289, 0
        %v347 = vsel %vm318, %v290, 0
        %v350 = vsel %vm318, %v291, 0
        %v353 = vsel %vm318, %v292, 0
        %v356 = vsel %vm318, %v293, 0
        %v359 = vsel %vm318, %v294, 0
        %v362 = vsel %vm318, %v295, 0
        %v365 = vsel %vm318, %v296, 0
        %v368 = vsel %vm318, %v297, 0
        %v371 = vsel %vm318, %v298, 0
        %v374 = vsel %vm318, %v299, 0
        %v377 = vsel %vm318, %v300, 0
        %v380 = vsel %vm318, %v301, 0
        %v383 = vsel %vm318, %v302, 0
        %v386 = vsel %vm318, %v303, 0
        %v389 = vsel %vm318, %v304, 0
        %v392 = vsel %vm318, %v305, 0
        %v395 = vsel %vm318, %v306, 0
        %v398 = vsel %vm318, %v307, 0
        %v401 = vsel %vm318, %v308, 0
        %v404 = vsel %vm318, %v309, 0
        %v407 = vsel %vm318, %v310, 0
        %v410 = vsel %vm318, %v311, 0
        %v413 = vsel %vm318, %v312, 0
        %vm415 = vcmask 1046528
        %v417 = vsel %vm415, %v313, 0
        %419 = vmatpush.msra.mxu0 0.0
        %420 = vmatpush.msra.mxu0 0.0
        %421 = vmatpush.msra.mxu0 0.0
        %422 = vmatpush.msra.mxu0 0.0
        %423 = vmatpush.msra.mxu0 0.0
        %424 = vmatpush.msra.mxu0 0.0
        %425 = vmatpush.msra.mxu0 0.0
        %426 = vmatpush.msra.mxu0 0.0
        %427 = vmatpush.msra.mxu0 0.0
        %428 = vmatpush.msra.mxu0 0.0
        %429 = vmatpush.msra.mxu0 0.0
        %430 = vmatpush.msra.mxu0 0.0
        %431 = vmatpush.msra.mxu0 0.0
        %432 = vmatpush.msra.mxu0 0.0
        %433 = vmatpush.msra.mxu0 0.0
        %434 = vmatpush.msra.mxu0 %v417
        %435 = vmatmul.f32.gmra.mxu0 %v320
        %v436 = vpop.f32.mrf.mxu0
        %v437 = vadd.f32 %v316, %v436
        %438 = vmatmul.f32.gmra.mxu0 %v323
        %v439 = vpop.f32.mrf.mxu0
        %v440 = vadd.f32 %v316, %v439
        %441 = vmatmul.f32.gmra.mxu0 %v326
        %v442 = vpop.f32.mrf.mxu0
        %v443 = vadd.f32 %v316, %v442
        %444 = vmatmul.f32.gmra.mxu0 %v329
        %v445 = vpop.f32.mrf.mxu0
        %v446 = vadd.f32 %v316, %v445
        %447 = vmatmul.f32.gmra.mxu0 %v332
        %v448 = vpop.f32.mrf.mxu0
        %v449 = vadd.f32 %v316, %v448
        %450 = vmatmul.f32.gmra.mxu0 %v335
        %v451 = vpop.f32.mrf.mxu0
        %v452 = vadd.f32 %v316, %v451
        %453 = vmatmul.f32.gmra.mxu0 %v338
        %v454 = vpop.f32.mrf.mxu0
        %v455 = vadd.f32 %v316, %v454
        %456 = vmatmul.f32.gmra.mxu0 %v341
        %v457 = vpop.f32.mrf.mxu0
        %v458 = vadd.f32 %v316, %v457
        %459 = vmatmul.f32.gmra.mxu0 %v344
        %v460 = vpop.f32.mrf.mxu0
        %v461 = vadd.f32 %v316, %v460
        %462 = vmatmul.f32.gmra.mxu0 %v347
        %v463 = vpop.f32.mrf.mxu0
        %v464 = vadd.f32 %v316, %v463
        %465 = vmatmul.f32.gmra.mxu0 %v350
        %v466 = vpop.f32.mrf.mxu0
        %v467 = vadd.f32 %v316, %v466
        %468 = vmatmul.f32.gmra.mxu0 %v353
        %v469 = vpop.f32.mrf.mxu0
        %v470 = vadd.f32 %v316, %v469
        %471 = vmatmul.f32.gmra.mxu0 %v356
        %v472 = vpop.f32.mrf.mxu0
        %v473 = vadd.f32 %v316, %v472
        %474 = vmatmul.f32.gmra.mxu0 %v359
        %v475 = vpop.f32.mrf.mxu0
        %v476 = vadd.f32 %v316, %v475
        %477 = vmatmul.f32.gmra.mxu0 %v362
        %v478 = vpop.f32.mrf.mxu0
        %v479 = vadd.f32 %v316, %v478
        %480 = vmatmul.f32.gmra.mxu0 %v365
        %v481 = vpop.f32.mrf.mxu0
        %v482 = vadd.f32 %v316, %v481
        %483 = vmatmul.f32.gmra.mxu0 %v368
        %v484 = vpop.f32.mrf.mxu0
        %v485 = vadd.f32 %v316, %v484
        %486 = vmatmul.f32.gmra.mxu0 %v371
        %v487 = vpop.f32.mrf.mxu0
        %v488 = vadd.f32 %v316, %v487
        %489 = vmatmul.f32.gmra.mxu0 %v374
        %v490 = vpop.f32.mrf.mxu0
        %v491 = vadd.f32 %v316, %v490
        %492 = vmatmul.f32.gmra.mxu0 %v377
        %v493 = vpop.f32.mrf.mxu0
        %v494 = vadd.f32 %v316, %v493
        %495 = vmatmul.f32.gmra.mxu0 %v380
        %v496 = vpop.f32.mrf.mxu0
        %v497 = vadd.f32 %v316, %v496
        %498 = vmatmul.f32.gmra.mxu0 %v383
        %v499 = vpop.f32.mrf.mxu0
        %v500 = vadd.f32 %v316, %v499
        %501 = vmatmul.f32.gmra.mxu0 %v386
        %v502 = vpop.f32.mrf.mxu0
        %v503 = vadd.f32 %v316, %v502
        %504 = vmatmul.f32.gmra.mxu0 %v389
        %v505 = vpop.f32.mrf.mxu0
        %v506 = vadd.f32 %v316, %v505
        %507 = vmatmul.f32.gmra.mxu0 %v392
        %v508 = vpop.f32.mrf.mxu0
        %v509 = vadd.f32 %v316, %v508
        %510 = vmatmul.f32.gmra.mxu0 %v395
        %v511 = vpop.f32.mrf.mxu0
        %v512 = vadd.f32 %v316, %v511
        %513 = vmatmul.f32.gmra.mxu0 %v398
        %v514 = vpop.f32.mrf.mxu0
        %v515 = vadd.f32 %v316, %v514
        %516 = vmatmul.f32.gmra.mxu0 %v401
        %v517 = vpop.f32.mrf.mxu0
        %v518 = vadd.f32 %v316, %v517
        %519 = vmatmul.f32.gmra.mxu0 %v404
        %v520 = vpop.f32.mrf.mxu0
        %v521 = vadd.f32 %v316, %v520
        %522 = vmatmul.f32.gmra.mxu0 %v407
        %v523 = vpop.f32.mrf.mxu0
        %v524 = vadd.f32 %v316, %v523
        %525 = vmatmul.f32.gmra.mxu0 %v410
        %v526 = vpop.f32.mrf.mxu0
        %v527 = vadd.f32 %v316, %v526
        %528 = vmatmul.f32.gmra.mxu0 %v413
        %v529 = vpop.f32.mrf.mxu0
        %v530 = vadd.f32 %v316, %v529
        %531 = vdwg.mxu0
        %vm532 = vcmask 523264
        %v533 = vsel %vm532, %v437, 0.0
        %534 = vadd.xlane.f32.xlu0 %v533
        %v535 = vpop.xlane.xlu0 %534
        %v536 = vsel %vm532, %v440, 0.0
        %537 = vadd.xlane.f32.xlu0 %v536
        %v538 = vpop.xlane.xlu0 %537
        %v539 = vsel %vm532, %v443, 0.0
        %540 = vadd.xlane.f32.xlu0 %v539
        %v541 = vpop.xlane.xlu0 %540
        %v542 = vsel %vm532, %v446, 0.0
        %543 = vadd.xlane.f32.xlu0 %v542
        %v544 = vpop.xlane.xlu0 %543
        %v545 = vsel %vm532, %v449, 0.0
        %546 = vadd.xlane.f32.xlu0 %v545
        %v547 = vpop.xlane.xlu0 %546
        %v548 = vsel %vm532, %v452, 0.0
        %549 = vadd.xlane.f32.xlu0 %v548
        %v550 = vpop.xlane.xlu0 %549
        %v551 = vsel %vm532, %v455, 0.0
        %552 = vadd.xlane.f32.xlu0 %v551
        %v553 = vpop.xlane.xlu0 %552
        %v554 = vsel %vm532, %v458, 0.0
        %555 = vadd.xlane.f32.xlu0 %v554
        %v556 = vpop.xlane.xlu0 %555
        %v557 = vsel %vm532, %v461, 0.0
        %558 = vadd.xlane.f32.xlu0 %v557
        %v559 = vpop.xlane.xlu0 %558
        %v560 = vsel %vm532, %v464, 0.0
        %561 = vadd.xlane.f32.xlu0 %v560
        %v562 = vpop.xlane.xlu0 %561
        %v563 = vsel %vm532, %v467, 0.0
        %564 = vadd.xlane.f32.xlu0 %v563
        %v565 = vpop.xlane.xlu0 %564
        %v566 = vsel %vm532, %v470, 0.0
        %567 = vadd.xlane.f32.xlu0 %v566
        %v568 = vpop.xlane.xlu0 %567
        %v569 = vsel %vm532, %v473, 0.0
        %570 = vadd.xlane.f32.xlu0 %v569
        %v571 = vpop.xlane.xlu0 %570
        %v572 = vsel %vm532, %v476, 0.0
        %573 = vadd.xlane.f32.xlu0 %v572
        %v574 = vpop.xlane.xlu0 %573
        %v575 = vsel %vm532, %v479, 0.0
        %576 = vadd.xlane.f32.xlu0 %v575
        %v577 = vpop.xlane.xlu0 %576
        %v578 = vsel %vm532, %v482, 0.0
        %579 = vadd.xlane.f32.xlu0 %v578
        %v580 = vpop.xlane.xlu0 %579
        %v581 = vsel %vm532, %v485, 0.0
        %582 = vadd.xlane.f32.xlu0 %v581
        %v583 = vpop.xlane.xlu0 %582
        %v584 = vsel %vm532, %v488, 0.0
        %585 = vadd.xlane.f32.xlu0 %v584
        %v586 = vpop.xlane.xlu0 %585
        %v587 = vsel %vm532, %v491, 0.0
        %588 = vadd.xlane.f32.xlu0 %v587
        %v589 = vpop.xlane.xlu0 %588
        %v590 = vsel %vm532, %v494, 0.0
        %591 = vadd.xlane.f32.xlu0 %v590
        %v592 = vpop.xlane.xlu0 %591
        %v593 = vsel %vm532, %v497, 0.0
        %594 = vadd.xlane.f32.xlu0 %v593
        %v595 = vpop.xlane.xlu0 %594
        %v596 = vsel %vm532, %v500, 0.0
        %597 = vadd.xlane.f32.xlu0 %v596
        %v598 = vpop.xlane.xlu0 %597
        %v599 = vsel %vm532, %v503, 0.0
        %600 = vadd.xlane.f32.xlu0 %v599
        %v601 = vpop.xlane.xlu0 %600
        %v602 = vsel %vm532, %v506, 0.0
        %603 = vadd.xlane.f32.xlu0 %v602
        %v604 = vpop.xlane.xlu0 %603
        %v605 = vsel %vm532, %v509, 0.0
        %606 = vadd.xlane.f32.xlu0 %v605
        %v607 = vpop.xlane.xlu0 %606
        %v608 = vsel %vm532, %v512, 0.0
        %609 = vadd.xlane.f32.xlu0 %v608
        %v610 = vpop.xlane.xlu0 %609
        %v611 = vsel %vm532, %v515, 0.0
        %612 = vadd.xlane.f32.xlu0 %v611
        %v613 = vpop.xlane.xlu0 %612
        %v614 = vsel %vm532, %v518, 0.0
        %615 = vadd.xlane.f32.xlu0 %v614
        %v616 = vpop.xlane.xlu0 %615
        %v617 = vsel %vm532, %v521, 0.0
        %618 = vadd.xlane.f32.xlu0 %v617
        %v619 = vpop.xlane.xlu0 %618
        %v620 = vsel %vm532, %v524, 0.0
        %621 = vadd.xlane.f32.xlu0 %v620
        %v622 = vpop.xlane.xlu0 %621
        %v623 = vsel %vm532, %v527, 0.0
        %624 = vadd.xlane.f32.xlu0 %v623
        %v625 = vpop.xlane.xlu0 %624
        %v626 = vsel %vm532, %v530, 0.0
        %627 = vadd.xlane.f32.xlu0 %v626
        %v628 = vpop.xlane.xlu0 %627
        %v629 = vrcp.pop 64.0
        %v630 = vmul.f32 64.0, %v629
        %v631 = vsub.f32 1.0, %v630
        %v632 = vmul.f32 %v629, %v631
        %v633 = vadd.f32 %v629, %v632
        %vm634 = vweird.f32 %v629
        %v635 = vsel %vm634, %v629, %v633
        %v636 = vmul.f32 %v535, %v635
        %v637 = vmul.f32 %v538, %v635
        %v638 = vmul.f32 %v541, %v635
        %v639 = vmul.f32 %v544, %v635
        %v640 = vmul.f32 %v547, %v635
        %v641 = vmul.f32 %v550, %v635
        %v642 = vmul.f32 %v553, %v635
        %v643 = vmul.f32 %v556, %v635
        %v644 = vmul.f32 %v559, %v635
        %v645 = vmul.f32 %v562, %v635
        %v646 = vmul.f32 %v565, %v635
        %v647 = vmul.f32 %v568, %v635
        %v648 = vmul.f32 %v571, %v635
        %v649 = vmul.f32 %v574, %v635
        %v650 = vmul.f32 %v577, %v635
        %v651 = vmul.f32 %v580, %v635
        %v652 = vmul.f32 %v583, %v635
        %v653 = vmul.f32 %v586, %v635
        %v654 = vmul.f32 %v589, %v635
        %v655 = vmul.f32 %v592, %v635
        %v656 = vmul.f32 %v595, %v635
        %v657 = vmul.f32 %v598, %v635
        %v658 = vmul.f32 %v601, %v635
        %v659 = vmul.f32 %v604, %v635
        %v660 = vmul.f32 %v607, %v635
        %v661 = vmul.f32 %v610, %v635
        %v662 = vmul.f32 %v613, %v635
        %v663 = vmul.f32 %v616, %v635
        %v664 = vmul.f32 %v619, %v635
        %v665 = vmul.f32 %v622, %v635
        %v666 = vmul.f32 %v625, %v635
        %v667 = vmul.f32 %v628, %v635
        %v668 = vsub.f32 %v437, %v636
        %v669 = vsub.f32 %v440, %v637
        %v670 = vsub.f32 %v443, %v638
        %v671 = vsub.f32 %v446, %v639
        %v672 = vsub.f32 %v449, %v640
        %v673 = vsub.f32 %v452, %v641
        %v674 = vsub.f32 %v455, %v642
        %v675 = vsub.f32 %v458, %v643
        %v676 = vsub.f32 %v461, %v644
        %v677 = vsub.f32 %v464, %v645
        %v678 = vsub.f32 %v467, %v646
        %v679 = vsub.f32 %v470, %v647
        %v680 = vsub.f32 %v473, %v648
        %v681 = vsub.f32 %v476, %v649
        %v682 = vsub.f32 %v479, %v650
        %v683 = vsub.f32 %v482, %v651
        %v684 = vsub.f32 %v485, %v652
        %v685 = vsub.f32 %v488, %v653
        %v686 = vsub.f32 %v491, %v654
        %v687 = vsub.f32 %v494, %v655
        %v688 = vsub.f32 %v497, %v656
        %v689 = vsub.f32 %v500, %v657
        %v690 = vsub.f32 %v503, %v658
        %v691 = vsub.f32 %v506, %v659
        %v692 = vsub.f32 %v509, %v660
        %v693 = vsub.f32 %v512, %v661
        %v694 = vsub.f32 %v515, %v662
        %v695 = vsub.f32 %v518, %v663
        %v696 = vsub.f32 %v521, %v664
        %v697 = vsub.f32 %v524, %v665
        %v698 = vsub.f32 %v527, %v666
        %v699 = vsub.f32 %v530, %v667
        %v700 = vmul.f32 %v668, %v668
        %v701 = vmul.f32 %v669, %v669
        %v702 = vmul.f32 %v670, %v670
        %v703 = vmul.f32 %v671, %v671
        %v704 = vmul.f32 %v672, %v672
        %v705 = vmul.f32 %v673, %v673
        %v706 = vmul.f32 %v674, %v674
        %v707 = vmul.f32 %v675, %v675
        %v708 = vmul.f32 %v676, %v676
        %v709 = vmul.f32 %v677, %v677
        %v710 = vmul.f32 %v678, %v678
        %v711 = vmul.f32 %v679, %v679
        %v712 = vmul.f32 %v680, %v680
        %v713 = vmul.f32 %v681, %v681
        %v714 = vmul.f32 %v682, %v682
        %v715 = vmul.f32 %v683, %v683
        %v716 = vmul.f32 %v684, %v684
        %v717 = vmul.f32 %v685, %v685
        %v718 = vmul.f32 %v686, %v686
        %v719 = vmul.f32 %v687, %v687
        %v720 = vmul.f32 %v688, %v688
        %v721 = vmul.f32 %v689, %v689
        %v722 = vmul.f32 %v690, %v690
        %v723 = vmul.f32 %v691, %v691
        %v724 = vmul.f32 %v692, %v692
        %v725 = vmul.f32 %v693, %v693
        %v726 = vmul.f32 %v694, %v694
        %v727 = vmul.f32 %v695, %v695
        %v728 = vmul.f32 %v696, %v696
        %v729 = vmul.f32 %v697, %v697
        %v730 = vmul.f32 %v698, %v698
        %v731 = vmul.f32 %v699, %v699
        %v732 = vsel %vm532, %v700, 0.0
        %733 = vadd.xlane.f32.xlu0 %v732
        %v734 = vpop.xlane.xlu0 %733
        %v735 = vsel %vm532, %v701, 0.0
        %736 = vadd.xlane.f32.xlu0 %v735
        %v737 = vpop.xlane.xlu0 %736
        %v738 = vsel %vm532, %v702, 0.0
        %739 = vadd.xlane.f32.xlu0 %v738
        %v740 = vpop.xlane.xlu0 %739
        %v741 = vsel %vm532, %v703, 0.0
        %742 = vadd.xlane.f32.xlu0 %v741
        %v743 = vpop.xlane.xlu0 %742
        %v744 = vsel %vm532, %v704, 0.0
        %745 = vadd.xlane.f32.xlu0 %v744
        %v746 = vpop.xlane.xlu0 %745
        %v747 = vsel %vm532, %v705, 0.0
        %748 = vadd.xlane.f32.xlu0 %v747
        %v749 = vpop.xlane.xlu0 %748
        %v750 = vsel %vm532, %v706, 0.0
        %751 = vadd.xlane.f32.xlu0 %v750
        %v752 = vpop.xlane.xlu0 %751
        %v753 = vsel %vm532, %v707, 0.0
        %754 = vadd.xlane.f32.xlu0 %v753
        %v755 = vpop.xlane.xlu0 %754
        %v756 = vsel %vm532, %v708, 0.0
        %757 = vadd.xlane.f32.xlu0 %v756
        %v758 = vpop.xlane.xlu0 %757
        %v759 = vsel %vm532, %v709, 0.0
        %760 = vadd.xlane.f32.xlu0 %v759
        %v761 = vpop.xlane.xlu0 %760
        %v762 = vsel %vm532, %v710, 0.0
        %763 = vadd.xlane.f32.xlu0 %v762
        %v764 = vpop.xlane.xlu0 %763
        %v765 = vsel %vm532, %v711, 0.0
        %766 = vadd.xlane.f32.xlu0 %v765
        %v767 = vpop.xlane.xlu0 %766
        %v768 = vsel %vm532, %v712, 0.0
        %769 = vadd.xlane.f32.xlu0 %v768
        %v770 = vpop.xlane.xlu0 %769
        %v771 = vsel %vm532, %v713, 0.0
        %772 = vadd.xlane.f32.xlu0 %v771
        %v773 = vpop.xlane.xlu0 %772
        %v774 = vsel %vm532, %v714, 0.0
        %775 = vadd.xlane.f32.xlu0 %v774
        %v776 = vpop.xlane.xlu0 %775
        %v777 = vsel %vm532, %v715, 0.0
        %778 = vadd.xlane.f32.xlu0 %v777
        %v779 = vpop.xlane.xlu0 %778
        %v780 = vsel %vm532, %v716, 0.0
        %781 = vadd.xlane.f32.xlu0 %v780
        %v782 = vpop.xlane.xlu0 %781
        %v783 = vsel %vm532, %v717, 0.0
        %784 = vadd.xlane.f32.xlu0 %v783
        %v785 = vpop.xlane.xlu0 %784
        %v786 = vsel %vm532, %v718, 0.0
        %787 = vadd.xlane.f32.xlu0 %v786
        %v788 = vpop.xlane.xlu0 %787
        %v789 = vsel %vm532, %v719, 0.0
        %790 = vadd.xlane.f32.xlu0 %v789
        %v791 = vpop.xlane.xlu0 %790
        %v792 = vsel %vm532, %v720, 0.0
        %793 = vadd.xlane.f32.xlu0 %v792
        %v794 = vpop.xlane.xlu0 %793
        %v795 = vsel %vm532, %v721, 0.0
        %796 = vadd.xlane.f32.xlu0 %v795
        %v797 = vpop.xlane.xlu0 %796
        %v798 = vsel %vm532, %v722, 0.0
        %799 = vadd.xlane.f32.xlu0 %v798
        %v800 = vpop.xlane.xlu0 %799
        %v801 = vsel %vm532, %v723, 0.0
        %802 = vadd.xlane.f32.xlu0 %v801
        %v803 = vpop.xlane.xlu0 %802
        %v804 = vsel %vm532, %v724, 0.0
        %805 = vadd.xlane.f32.xlu0 %v804
        %v806 = vpop.xlane.xlu0 %805
        %v807 = vsel %vm532, %v725, 0.0
        %808 = vadd.xlane.f32.xlu0 %v807
        %v809 = vpop.xlane.xlu0 %808
        %v810 = vsel %vm532, %v726, 0.0
        %811 = vadd.xlane.f32.xlu0 %v810
        %v812 = vpop.xlane.xlu0 %811
        %v813 = vsel %vm532, %v727, 0.0
        %814 = vadd.xlane.f32.xlu0 %v813
        %v815 = vpop.xlane.xlu0 %814
        %v816 = vsel %vm532, %v728, 0.0
        %817 = vadd.xlane.f32.xlu0 %v816
        %v818 = vpop.xlane.xlu0 %817
        %v819 = vsel %vm532, %v729, 0.0
        %820 = vadd.xlane.f32.xlu0 %v819
        %v821 = vpop.xlane.xlu0 %820
        %v822 = vsel %vm532, %v730, 0.0
        %823 = vadd.xlane.f32.xlu0 %v822
        %v824 = vpop.xlane.xlu0 %823
        %v825 = vsel %vm532, %v731, 0.0
        %826 = vadd.xlane.f32.xlu0 %v825
        %v827 = vpop.xlane.xlu0 %826
        %v828 = vmul.f32 %v734, %v635
        %v829 = vmul.f32 %v737, %v635
        %v830 = vmul.f32 %v740, %v635
        %v831 = vmul.f32 %v743, %v635
        %v832 = vmul.f32 %v746, %v635
        %v833 = vmul.f32 %v749, %v635
        %v834 = vmul.f32 %v752, %v635
        %v835 = vmul.f32 %v755, %v635
        %v836 = vmul.f32 %v758, %v635
        %v837 = vmul.f32 %v761, %v635
        %v838 = vmul.f32 %v764, %v635
        %v839 = vmul.f32 %v767, %v635
        %v840 = vmul.f32 %v770, %v635
        %v841 = vmul.f32 %v773, %v635
        %v842 = vmul.f32 %v776, %v635
        %v843 = vmul.f32 %v779, %v635
        %v844 = vmul.f32 %v782, %v635
        %v845 = vmul.f32 %v785, %v635
        %v846 = vmul.f32 %v788, %v635
        %v847 = vmul.f32 %v791, %v635
        %v848 = vmul.f32 %v794, %v635
        %v849 = vmul.f32 %v797, %v635
        %v850 = vmul.f32 %v800, %v635
        %v851 = vmul.f32 %v803, %v635
        %v852 = vmul.f32 %v806, %v635
        %v853 = vmul.f32 %v809, %v635
        %v854 = vmul.f32 %v812, %v635
        %v855 = vmul.f32 %v815, %v635
        %v856 = vmul.f32 %v818, %v635
        %v857 = vmul.f32 %v821, %v635
        %v858 = vmul.f32 %v824, %v635
        %v859 = vmul.f32 %v827, %v635
        %v860 = vadd.f32 %v828, 1e-05
        %v861 = vadd.f32 %v829, 1e-05
        %v862 = vadd.f32 %v830, 1e-05
        %v863 = vadd.f32 %v831, 1e-05
        %v864 = vadd.f32 %v832, 1e-05
        %v865 = vadd.f32 %v833, 1e-05
        %v866 = vadd.f32 %v834, 1e-05
        %v867 = vadd.f32 %v835, 1e-05
        %v868 = vadd.f32 %v836, 1e-05
        %v869 = vadd.f32 %v837, 1e-05
        %v870 = vadd.f32 %v838, 1e-05
        %v871 = vadd.f32 %v839, 1e-05
        %v872 = vadd.f32 %v840, 1e-05
        %v873 = vadd.f32 %v841, 1e-05
        %v874 = vadd.f32 %v842, 1e-05
        %v875 = vadd.f32 %v843, 1e-05
        %v876 = vadd.f32 %v844, 1e-05
        %v877 = vadd.f32 %v845, 1e-05
        %v878 = vadd.f32 %v846, 1e-05
        %v879 = vadd.f32 %v847, 1e-05
        %v880 = vadd.f32 %v848, 1e-05
        %v881 = vadd.f32 %v849, 1e-05
        %v882 = vadd.f32 %v850, 1e-05
        %v883 = vadd.f32 %v851, 1e-05
        %v884 = vadd.f32 %v852, 1e-05
        %v885 = vadd.f32 %v853, 1e-05
        %v886 = vadd.f32 %v854, 1e-05
        %v887 = vadd.f32 %v855, 1e-05
        %v888 = vadd.f32 %v856, 1e-05
        %v889 = vadd.f32 %v857, 1e-05
        %v890 = vadd.f32 %v858, 1e-05
        %v891 = vadd.f32 %v859, 1e-05
        %v892 = vrsqrt.pop %v860
        %v893 = vmul.f32 %v892, %v860
        %v894 = vmul.f32 %v893, %v892
        %v895 = vmul.f32 0.5, %v894
        %v896 = vsub.f32 1.5, %v895
        %v897 = vmul.f32 %v892, %v896
        %vm898 = vweird.f32 %v860
        %vm899 = vweird.f32 %v892
        %vm900 = vmor %vm898, %vm899
        %v901 = vsel %vm900, %v892, %v897
        %v902 = vrsqrt.pop %v861
        %v903 = vmul.f32 %v902, %v861
        %v904 = vmul.f32 %v903, %v902
        %v905 = vmul.f32 0.5, %v904
        %v906 = vsub.f32 1.5, %v905
        %v907 = vmul.f32 %v902, %v906
        %vm908 = vweird.f32 %v861
        %vm909 = vweird.f32 %v902
        %vm910 = vmor %vm908, %vm909
        %v911 = vsel %vm910, %v902, %v907
        %v912 = vrsqrt.pop %v862
        %v913 = vmul.f32 %v912, %v862
        %v914 = vmul.f32 %v913, %v912
        %v915 = vmul.f32 0.5, %v914
        %v916 = vsub.f32 1.5, %v915
        %v917 = vmul.f32 %v912, %v916
        %vm918 = vweird.f32 %v862
        %vm919 = vweird.f32 %v912
        %vm920 = vmor %vm918, %vm919
        %v921 = vsel %vm920, %v912, %v917
        %v922 = vrsqrt.pop %v863
        %v923 = vmul.f32 %v922, %v863
        %v924 = vmul.f32 %v923, %v922
        %v925 = vmul.f32 0.5, %v924
        %v926 = vsub.f32 1.5, %v925
        %v927 = vmul.f32 %v922, %v926
        %vm928 = vweird.f32 %v863
        %vm929 = vweird.f32 %v922
        %vm930 = vmor %vm928, %vm929
        %v931 = vsel %vm930, %v922, %v927
        %v932 = vrsqrt.pop %v864
        %v933 = vmul.f32 %v932, %v864
        %v934 = vmul.f32 %v933, %v932
        %v935 = vmul.f32 0.5, %v934
        %v936 = vsub.f32 1.5, %v935
        %v937 = vmul.f32 %v932, %v936
        %vm938 = vweird.f32 %v864
        %vm939 = vweird.f32 %v932
        %vm940 = vmor %vm938, %vm939
        %v941 = vsel %vm940, %v932, %v937
        %v942 = vrsqrt.pop %v865
        %v943 = vmul.f32 %v942, %v865
        %v944 = vmul.f32 %v943, %v942
        %v945 = vmul.f32 0.5, %v944
        %v946 = vsub.f32 1.5, %v945
        %v947 = vmul.f32 %v942, %v946
        %vm948 = vweird.f32 %v865
        %vm949 = vweird.f32 %v942
        %vm950 = vmor %vm948, %vm949
        %v951 = vsel %vm950, %v942, %v947
        %v952 = vrsqrt.pop %v866
        %v953 = vmul.f32 %v952, %v866
        %v954 = vmul.f32 %v953, %v952
        %v955 = vmul.f32 0.5, %v954
        %v956 = vsub.f32 1.5, %v955
        %v957 = vmul.f32 %v952, %v956
        %vm958 = vweird.f32 %v866
        %vm959 = vweird.f32 %v952
        %vm960 = vmor %vm958, %vm959
        %v961 = vsel %vm960, %v952, %v957
        %v962 = vrsqrt.pop %v867
        %v963 = vmul.f32 %v962, %v867
        %v964 = vmul.f32 %v963, %v962
        %v965 = vmul.f32 0.5, %v964
        %v966 = vsub.f32 1.5, %v965
        %v967 = vmul.f32 %v962, %v966
        %vm968 = vweird.f32 %v867
        %vm969 = vweird.f32 %v962
        %vm970 = vmor %vm968, %vm969
        %v971 = vsel %vm970, %v962, %v967
        %v972 = vrsqrt.pop %v868
        %v973 = vmul.f32 %v972, %v868
        %v974 = vmul.f32 %v973, %v972
        %v975 = vmul.f32 0.5, %v974
        %v976 = vsub.f32 1.5, %v975
        %v977 = vmul.f32 %v972, %v976
        %vm978 = vweird.f32 %v868
        %vm979 = vweird.f32 %v972
        %vm980 = vmor %vm978, %vm979
        %v981 = vsel %vm980, %v972, %v977
        %v982 = vrsqrt.pop %v869
        %v983 = vmul.f32 %v982, %v869
        %v984 = vmul.f32 %v983, %v982
        %v985 = vmul.f32 0.5, %v984
        %v986 = vsub.f32 1.5, %v985
        %v987 = vmul.f32 %v982, %v986
        %vm988 = vweird.f32 %v869
        %vm989 = vweird.f32 %v982
        %vm990 = vmor %vm988, %vm989
        %v991 = vsel %vm990, %v982, %v987
        %v992 = vrsqrt.pop %v870
        %v993 = vmul.f32 %v992, %v870
        %v994 = vmul.f32 %v993, %v992
        %v995 = vmul.f32 0.5, %v994
        %v996 = vsub.f32 1.5, %v995
        %v997 = vmul.f32 %v992, %v996
        %vm998 = vweird.f32 %v870
        %vm999 = vweird.f32 %v992
        %vm1000 = vmor %vm998, %vm999
        %v1001 = vsel %vm1000, %v992, %v997
        %v1002 = vrsqrt.pop %v871
        %v1003 = vmul.f32 %v1002, %v871
        %v1004 = vmul.f32 %v1003, %v1002
        %v1005 = vmul.f32 0.5, %v1004
        %v1006 = vsub.f32 1.5, %v1005
        %v1007 = vmul.f32 %v1002, %v1006
        %vm1008 = vweird.f32 %v871
        %vm1009 = vweird.f32 %v1002
        %vm1010 = vmor %vm1008, %vm1009
        %v1011 = vsel %vm1010, %v1002, %v1007
        %v1012 = vrsqrt.pop %v872
        %v1013 = vmul.f32 %v1012, %v872
        %v1014 = vmul.f32 %v1013, %v1012
        %v1015 = vmul.f32 0.5, %v1014
        %v1016 = vsub.f32 1.5, %v1015
        %v1017 = vmul.f32 %v1012, %v1016
        %vm1018 = vweird.f32 %v872
        %vm1019 = vweird.f32 %v1012
        %vm1020 = vmor %vm1018, %vm1019
        %v1021 = vsel %vm1020, %v1012, %v1017
        %v1022 = vrsqrt.pop %v873
        %v1023 = vmul.f32 %v1022, %v873
        %v1024 = vmul.f32 %v1023, %v1022
        %v1025 = vmul.f32 0.5, %v1024
        %v1026 = vsub.f32 1.5, %v1025
        %v1027 = vmul.f32 %v1022, %v1026
        %vm1028 = vweird.f32 %v873
        %vm1029 = vweird.f32 %v1022
        %vm1030 = vmor %vm1028, %vm1029
        %v1031 = vsel %vm1030, %v1022, %v1027
        %v1032 = vrsqrt.pop %v874
        %v1033 = vmul.f32 %v1032, %v874
        %v1034 = vmul.f32 %v1033, %v1032
        %v1035 = vmul.f32 0.5, %v1034
        %v1036 = vsub.f32 1.5, %v1035
        %v1037 = vmul.f32 %v1032, %v1036
        %vm1038 = vweird.f32 %v874
        %vm1039 = vweird.f32 %v1032
        %vm1040 = vmor %vm1038, %vm1039
        %v1041 = vsel %vm1040, %v1032, %v1037
        %v1042 = vrsqrt.pop %v875
        %v1043 = vmul.f32 %v1042, %v875
        %v1044 = vmul.f32 %v1043, %v1042
        %v1045 = vmul.f32 0.5, %v1044
        %v1046 = vsub.f32 1.5, %v1045
        %v1047 = vmul.f32 %v1042, %v1046
        %vm1048 = vweird.f32 %v875
        %vm1049 = vweird.f32 %v1042
        %vm1050 = vmor %vm1048, %vm1049
        %v1051 = vsel %vm1050, %v1042, %v1047
        %v1052 = vrsqrt.pop %v876
        %v1053 = vmul.f32 %v1052, %v876
        %v1054 = vmul.f32 %v1053, %v1052
        %v1055 = vmul.f32 0.5, %v1054
        %v1056 = vsub.f32 1.5, %v1055
        %v1057 = vmul.f32 %v1052, %v1056
        %vm1058 = vweird.f32 %v876
        %vm1059 = vweird.f32 %v1052
        %vm1060 = vmor %vm1058, %vm1059
        %v1061 = vsel %vm1060, %v1052, %v1057
        %v1062 = vrsqrt.pop %v877
        %v1063 = vmul.f32 %v1062, %v877
        %v1064 = vmul.f32 %v1063, %v1062
        %v1065 = vmul.f32 0.5, %v1064
        %v1066 = vsub.f32 1.5, %v1065
        %v1067 = vmul.f32 %v1062, %v1066
        %vm1068 = vweird.f32 %v877
        %vm1069 = vweird.f32 %v1062
        %vm1070 = vmor %vm1068, %vm1069
        %v1071 = vsel %vm1070, %v1062, %v1067
        %v1072 = vrsqrt.pop %v878
        %v1073 = vmul.f32 %v1072, %v878
        %v1074 = vmul.f32 %v1073, %v1072
        %v1075 = vmul.f32 0.5, %v1074
        %v1076 = vsub.f32 1.5, %v1075
        %v1077 = vmul.f32 %v1072, %v1076
        %vm1078 = vweird.f32 %v878
        %vm1079 = vweird.f32 %v1072
        %vm1080 = vmor %vm1078, %vm1079
        %v1081 = vsel %vm1080, %v1072, %v1077
        %v1082 = vrsqrt.pop %v879
        %v1083 = vmul.f32 %v1082, %v879
        %v1084 = vmul.f32 %v1083, %v1082
        %v1085 = vmul.f32 0.5, %v1084
        %v1086 = vsub.f32 1.5, %v1085
        %v1087 = vmul.f32 %v1082, %v1086
        %vm1088 = vweird.f32 %v879
        %vm1089 = vweird.f32 %v1082
        %vm1090 = vmor %vm1088, %vm1089
        %v1091 = vsel %vm1090, %v1082, %v1087
        %v1092 = vrsqrt.pop %v880
        %v1093 = vmul.f32 %v1092, %v880
        %v1094 = vmul.f32 %v1093, %v1092
        %v1095 = vmul.f32 0.5, %v1094
        %v1096 = vsub.f32 1.5, %v1095
        %v1097 = vmul.f32 %v1092, %v1096
        %vm1098 = vweird.f32 %v880
        %vm1099 = vweird.f32 %v1092
        %vm1100 = vmor %vm1098, %vm1099
        %v1101 = vsel %vm1100, %v1092, %v1097
        %v1102 = vrsqrt.pop %v881
        %v1103 = vmul.f32 %v1102, %v881
        %v1104 = vmul.f32 %v1103, %v1102
        %v1105 = vmul.f32 0.5, %v1104
        %v1106 = vsub.f32 1.5, %v1105
        %v1107 = vmul.f32 %v1102, %v1106
        %vm1108 = vweird.f32 %v881
        %vm1109 = vweird.f32 %v1102
        %vm1110 = vmor %vm1108, %vm1109
        %v1111 = vsel %vm1110, %v1102, %v1107
        %v1112 = vrsqrt.pop %v882
        %v1113 = vmul.f32 %v1112, %v882
        %v1114 = vmul.f32 %v1113, %v1112
        %v1115 = vmul.f32 0.5, %v1114
        %v1116 = vsub.f32 1.5, %v1115
        %v1117 = vmul.f32 %v1112, %v1116
        %vm1118 = vweird.f32 %v882
        %vm1119 = vweird.f32 %v1112
        %vm1120 = vmor %vm1118, %vm1119
        %v1121 = vsel %vm1120, %v1112, %v1117
        %v1122 = vrsqrt.pop %v883
        %v1123 = vmul.f32 %v1122, %v883
        %v1124 = vmul.f32 %v1123, %v1122
        %v1125 = vmul.f32 0.5, %v1124
        %v1126 = vsub.f32 1.5, %v1125
        %v1127 = vmul.f32 %v1122, %v1126
        %vm1128 = vweird.f32 %v883
        %vm1129 = vweird.f32 %v1122
        %vm1130 = vmor %vm1128, %vm1129
        %v1131 = vsel %vm1130, %v1122, %v1127
        %v1132 = vrsqrt.pop %v884
        %v1133 = vmul.f32 %v1132, %v884
        %v1134 = vmul.f32 %v1133, %v1132
        %v1135 = vmul.f32 0.5, %v1134
        %v1136 = vsub.f32 1.5, %v1135
        %v1137 = vmul.f32 %v1132, %v1136
        %vm1138 = vweird.f32 %v884
        %vm1139 = vweird.f32 %v1132
        %vm1140 = vmor %vm1138, %vm1139
        %v1141 = vsel %vm1140, %v1132, %v1137
        %v1142 = vrsqrt.pop %v885
        %v1143 = vmul.f32 %v1142, %v885
        %v1144 = vmul.f32 %v1143, %v1142
        %v1145 = vmul.f32 0.5, %v1144
        %v1146 = vsub.f32 1.5, %v1145
        %v1147 = vmul.f32 %v1142, %v1146
        %vm1148 = vweird.f32 %v885
        %vm1149 = vweird.f32 %v1142
        %vm1150 = vmor %vm1148, %vm1149
        %v1151 = vsel %vm1150, %v1142, %v1147
        %v1152 = vrsqrt.pop %v886
        %v1153 = vmul.f32 %v1152, %v886
        %v1154 = vmul.f32 %v1153, %v1152
        %v1155 = vmul.f32 0.5, %v1154
        %v1156 = vsub.f32 1.5, %v1155
        %v1157 = vmul.f32 %v1152, %v1156
        %vm1158 = vweird.f32 %v886
        %vm1159 = vweird.f32 %v1152
        %vm1160 = vmor %vm1158, %vm1159
        %v1161 = vsel %vm1160, %v1152, %v1157
        %v1162 = vrsqrt.pop %v887
        %v1163 = vmul.f32 %v1162, %v887
        %v1164 = vmul.f32 %v1163, %v1162
        %v1165 = vmul.f32 0.5, %v1164
        %v1166 = vsub.f32 1.5, %v1165
        %v1167 = vmul.f32 %v1162, %v1166
        %vm1168 = vweird.f32 %v887
        %vm1169 = vweird.f32 %v1162
        %vm1170 = vmor %vm1168, %vm1169
        %v1171 = vsel %vm1170, %v1162, %v1167
        %v1172 = vrsqrt.pop %v888
        %v1173 = vmul.f32 %v1172, %v888
        %v1174 = vmul.f32 %v1173, %v1172
        %v1175 = vmul.f32 0.5, %v1174
        %v1176 = vsub.f32 1.5, %v1175
        %v1177 = vmul.f32 %v1172, %v1176
        %vm1178 = vweird.f32 %v888
        %vm1179 = vweird.f32 %v1172
        %vm1180 = vmor %vm1178, %vm1179
        %v1181 = vsel %vm1180, %v1172, %v1177
        %v1182 = vrsqrt.pop %v889
        %v1183 = vmul.f32 %v1182, %v889
        %v1184 = vmul.f32 %v1183, %v1182
        %v1185 = vmul.f32 0.5, %v1184
        %v1186 = vsub.f32 1.5, %v1185
        %v1187 = vmul.f32 %v1182, %v1186
        %vm1188 = vweird.f32 %v889
        %vm1189 = vweird.f32 %v1182
        %vm1190 = vmor %vm1188, %vm1189
        %v1191 = vsel %vm1190, %v1182, %v1187
        %v1192 = vrsqrt.pop %v890
        %v1193 = vmul.f32 %v1192, %v890
        %v1194 = vmul.f32 %v1193, %v1192
        %v1195 = vmul.f32 0.5, %v1194
        %v1196 = vsub.f32 1.5, %v1195
        %v1197 = vmul.f32 %v1192, %v1196
        %vm1198 = vweird.f32 %v890
        %vm1199 = vweird.f32 %v1192
        %vm1200 = vmor %vm1198, %vm1199
        %v1201 = vsel %vm1200, %v1192, %v1197
        %v1202 = vrsqrt.pop %v891
        %v1203 = vmul.f32 %v1202, %v891
        %v1204 = vmul.f32 %v1203, %v1202
        %v1205 = vmul.f32 0.5, %v1204
        %v1206 = vsub.f32 1.5, %v1205
        %v1207 = vmul.f32 %v1202, %v1206
        %vm1208 = vweird.f32 %v891
        %vm1209 = vweird.f32 %v1202
        %vm1210 = vmor %vm1208, %vm1209
        %v1211 = vsel %vm1210, %v1202, %v1207
        %v1212 = vmul.f32 %v668, %v901
        %v1213 = vmul.f32 %v669, %v911
        %v1214 = vmul.f32 %v670, %v921
        %v1215 = vmul.f32 %v671, %v931
        %v1216 = vmul.f32 %v672, %v941
        %v1217 = vmul.f32 %v673, %v951
        %v1218 = vmul.f32 %v674, %v961
        %v1219 = vmul.f32 %v675, %v971
        %v1220 = vmul.f32 %v676, %v981
        %v1221 = vmul.f32 %v677, %v991
        %v1222 = vmul.f32 %v678, %v1001
        %v1223 = vmul.f32 %v679, %v1011
        %v1224 = vmul.f32 %v680, %v1021
        %v1225 = vmul.f32 %v681, %v1031
        %v1226 = vmul.f32 %v682, %v1041
        %v1227 = vmul.f32 %v683, %v1051
        %v1228 = vmul.f32 %v684, %v1061
        %v1229 = vmul.f32 %v685, %v1071
        %v1230 = vmul.f32 %v686, %v1081
        %v1231 = vmul.f32 %v687, %v1091
        %v1232 = vmul.f32 %v688, %v1101
        %v1233 = vmul.f32 %v689, %v1111
        %v1234 = vmul.f32 %v690, %v1121
        %v1235 = vmul.f32 %v691, %v1131
        %v1236 = vmul.f32 %v692, %v1141
        %v1237 = vmul.f32 %v693, %v1151
        %v1238 = vmul.f32 %v694, %v1161
        %v1239 = vmul.f32 %v695, %v1171
        %v1240 = vmul.f32 %v696, %v1181
        %v1241 = vmul.f32 %v697, %v1191
        %v1242 = vmul.f32 %v698, %v1201
        %v1243 = vmul.f32 %v699, %v1211
        %v1244 = vld [vmem:[%s4] sm:$0x1]
        %v1246 = vperm.slane %v1244, 0
        %v1248 = vmul.f32 %v1212, %v1246
        %v1249 = vmul.f32 %v1213, %v1246
        %v1250 = vmul.f32 %v1214, %v1246
        %v1251 = vmul.f32 %v1215, %v1246
        %v1252 = vmul.f32 %v1216, %v1246
        %v1253 = vmul.f32 %v1217, %v1246
        %v1254 = vmul.f32 %v1218, %v1246
        %v1255 = vmul.f32 %v1219, %v1246
        %v1256 = vmul.f32 %v1220, %v1246
        %v1257 = vmul.f32 %v1221, %v1246
        %v1258 = vmul.f32 %v1222, %v1246
        %v1259 = vmul.f32 %v1223, %v1246
        %v1260 = vmul.f32 %v1224, %v1246
        %v1261 = vmul.f32 %v1225, %v1246
        %v1262 = vmul.f32 %v1226, %v1246
        %v1263 = vmul.f32 %v1227, %v1246
        %v1264 = vmul.f32 %v1228, %v1246
        %v1265 = vmul.f32 %v1229, %v1246
        %v1266 = vmul.f32 %v1230, %v1246
        %v1267 = vmul.f32 %v1231, %v1246
        %v1268 = vmul.f32 %v1232, %v1246
        %v1269 = vmul.f32 %v1233, %v1246
        %v1270 = vmul.f32 %v1234, %v1246
        %v1271 = vmul.f32 %v1235, %v1246
        %v1272 = vmul.f32 %v1236, %v1246
        %v1273 = vmul.f32 %v1237, %v1246
        %v1274 = vmul.f32 %v1238, %v1246
        %v1275 = vmul.f32 %v1239, %v1246
        %v1276 = vmul.f32 %v1240, %v1246
        %v1277 = vmul.f32 %v1241, %v1246
        %v1278 = vmul.f32 %v1242, %v1246
        %v1279 = vmul.f32 %v1243, %v1246
        %v1280 = vld [vmem:[%s5] sm:$0x1]
        %v1282 = vperm.slane %v1280, 0
        %v1284 = vadd.f32 %v1248, %v1282
        %v1285 = vadd.f32 %v1249, %v1282
        %v1286 = vadd.f32 %v1250, %v1282
        %v1287 = vadd.f32 %v1251, %v1282
        %v1288 = vadd.f32 %v1252, %v1282
        %v1289 = vadd.f32 %v1253, %v1282
        %v1290 = vadd.f32 %v1254, %v1282
        %v1291 = vadd.f32 %v1255, %v1282
        %v1292 = vadd.f32 %v1256, %v1282
        %v1293 = vadd.f32 %v1257, %v1282
        %v1294 = vadd.f32 %v1258, %v1282
        %v1295 = vadd.f32 %v1259, %v1282
        %v1296 = vadd.f32 %v1260, %v1282
        %v1297 = vadd.f32 %v1261, %v1282
        %v1298 = vadd.f32 %v1262, %v1282
        %v1299 = vadd.f32 %v1263, %v1282
        %v1300 = vadd.f32 %v1264, %v1282
        %v1301 = vadd.f32 %v1265, %v1282
        %v1302 = vadd.f32 %v1266, %v1282
        %v1303 = vadd.f32 %v1267, %v1282
        %v1304 = vadd.f32 %v1268, %v1282
        %v1305 = vadd.f32 %v1269, %v1282
        %v1306 = vadd.f32 %v1270, %v1282
        %v1307 = vadd.f32 %v1271, %v1282
        %v1308 = vadd.f32 %v1272, %v1282
        %v1309 = vadd.f32 %v1273, %v1282
        %v1310 = vadd.f32 %v1274, %v1282
        %v1311 = vadd.f32 %v1275, %v1282
        %v1312 = vadd.f32 %v1276, %v1282
        %v1313 = vadd.f32 %v1277, %v1282
        %v1314 = vadd.f32 %v1278, %v1282
        %v1315 = vadd.f32 %v1279, %v1282
        %v1316 = vmax.f32 %v1284, 0.0
        %v1317 = vmax.f32 %v1285, 0.0
        %v1318 = vmax.f32 %v1286, 0.0
        %v1319 = vmax.f32 %v1287, 0.0
        %v1320 = vmax.f32 %v1288, 0.0
        %v1321 = vmax.f32 %v1289, 0.0
        %v1322 = vmax.f32 %v1290, 0.0
        %v1323 = vmax.f32 %v1291, 0.0
        %v1324 = vmax.f32 %v1292, 0.0
        %v1325 = vmax.f32 %v1293, 0.0
        %v1326 = vmax.f32 %v1294, 0.0
        %v1327 = vmax.f32 %v1295, 0.0
        %v1328 = vmax.f32 %v1296, 0.0
        %v1329 = vmax.f32 %v1297, 0.0
        %v1330 = vmax.f32 %v1298, 0.0
        %v1331 = vmax.f32 %v1299, 0.0
        %v1332 = vmax.f32 %v1300, 0.0
        %v1333 = vmax.f32 %v1301, 0.0
        %v1334 = vmax.f32 %v1302, 0.0
        %v1335 = vmax.f32 %v1303, 0.0
        %v1336 = vmax.f32 %v1304, 0.0
        %v1337 = vmax.f32 %v1305, 0.0
        %v1338 = vmax.f32 %v1306, 0.0
        %v1339 = vmax.f32 %v1307, 0.0
        %v1340 = vmax.f32 %v1308, 0.0
        %v1341 = vmax.f32 %v1309, 0.0
        %v1342 = vmax.f32 %v1310, 0.0
        %v1343 = vmax.f32 %v1311, 0.0
        %v1344 = vmax.f32 %v1312, 0.0
        %v1345 = vmax.f32 %v1313, 0.0
        %v1346 = vmax.f32 %v1314, 0.0
        %v1347 = vmax.f32 %v1315, 0.0
        %v1348 = vsel %vm532, %v1316, -inf
        %v1349 = vsel %vm532, %v1317, -inf
        %v1350 = vmax.f32 %v1348, %v1349
        %v1351 = vrot.slane %v1350, 4
        %v1352 = vmax.f32 %v1350, %v1351
        %v1353 = vrot.slane %v1352, 2
        %v1354 = vmax.f32 %v1352, %v1353
        %v1355 = vrot.slane %v1354, 1
        %v1356 = vmax.f32 %v1354, %v1355
        %v1357 = vsel %vm532, %v1318, -inf
        %v1358 = vsel %vm532, %v1319, -inf
        %v1359 = vmax.f32 %v1357, %v1358
        %v1360 = vrot.slane %v1359, 4
        %v1361 = vmax.f32 %v1359, %v1360
        %v1362 = vrot.slane %v1361, 2
        %v1363 = vmax.f32 %v1361, %v1362
        %v1364 = vrot.slane %v1363, 1
        %v1365 = vmax.f32 %v1363, %v1364
        %v1366 = vsel %vm532, %v1320, -inf
        %v1367 = vsel %vm532, %v1321, -inf
        %v1368 = vmax.f32 %v1366, %v1367
        %v1369 = vrot.slane %v1368, 4
        %v1370 = vmax.f32 %v1368, %v1369
        %v1371 = vrot.slane %v1370, 2
        %v1372 = vmax.f32 %v1370, %v1371
        %v1373 = vrot.slane %v1372, 1
        %v1374 = vmax.f32 %v1372, %v1373
        %v1375 = vsel %vm532, %v1322, -inf
        %v1376 = vsel %vm532, %v1323, -inf
        %v1377 = vmax.f32 %v1375, %v1376
        %v1378 = vrot.slane %v1377, 4
        %v1379 = vmax.f32 %v1377, %v1378
        %v1380 = vrot.slane %v1379, 2
        %v1381 = vmax.f32 %v1379, %v1380
        %v1382 = vrot.slane %v1381, 1
        %v1383 = vmax.f32 %v1381, %v1382
        %v1384 = vsel %vm532, %v1324, -inf
        %v1385 = vsel %vm532, %v1325, -inf
        %v1386 = vmax.f32 %v1384, %v1385
        %v1387 = vrot.slane %v1386, 4
        %v1388 = vmax.f32 %v1386, %v1387
        %v1389 = vrot.slane %v1388, 2
        %v1390 = vmax.f32 %v1388, %v1389
        %v1391 = vrot.slane %v1390, 1
        %v1392 = vmax.f32 %v1390, %v1391
        %v1393 = vsel %vm532, %v1326, -inf
        %v1394 = vsel %vm532, %v1327, -inf
        %v1395 = vmax.f32 %v1393, %v1394
        %v1396 = vrot.slane %v1395, 4
        %v1397 = vmax.f32 %v1395, %v1396
        %v1398 = vrot.slane %v1397, 2
        %v1399 = vmax.f32 %v1397, %v1398
        %v1400 = vrot.slane %v1399, 1
        %v1401 = vmax.f32 %v1399, %v1400
        %v1402 = vsel %vm532, %v1328, -inf
        %v1403 = vsel %vm532, %v1329, -inf
        %v1404 = vmax.f32 %v1402, %v1403
        %v1405 = vrot.slane %v1404, 4
        %v1406 = vmax.f32 %v1404, %v1405
        %v1407 = vrot.slane %v1406, 2
        %v1408 = vmax.f32 %v1406, %v1407
        %v1409 = vrot.slane %v1408, 1
        %v1410 = vmax.f32 %v1408, %v1409
        %v1411 = vsel %vm532, %v1330, -inf
        %v1412 = vsel %vm532, %v1331, -inf
        %v1413 = vmax.f32 %v1411, %v1412
        %v1414 = vrot.slane %v1413, 4
        %v1415 = vmax.f32 %v1413, %v1414
        %v1416 = vrot.slane %v1415, 2
        %v1417 = vmax.f32 %v1415, %v1416
        %v1418 = vrot.slane %v1417, 1
        %v1419 = vmax.f32 %v1417, %v1418
        %v1420 = vsel %vm532, %v1332, -inf
        %v1421 = vsel %vm532, %v1333, -inf
        %v1422 = vmax.f32 %v1420, %v1421
        %v1423 = vrot.slane %v1422, 4
        %v1424 = vmax.f32 %v1422, %v1423
        %v1425 = vrot.slane %v1424, 2
        %v1426 = vmax.f32 %v1424, %v1425
        %v1427 = vrot.slane %v1426, 1
        %v1428 = vmax.f32 %v1426, %v1427
        %v1429 = vsel %vm532, %v1334, -inf
        %v1430 = vsel %vm532, %v1335, -inf
        %v1431 = vmax.f32 %v1429, %v1430
        %v1432 = vrot.slane %v1431, 4
        %v1433 = vmax.f32 %v1431, %v1432
        %v1434 = vrot.slane %v1433, 2
        %v1435 = vmax.f32 %v1433, %v1434
        %v1436 = vrot.slane %v1435, 1
        %v1437 = vmax.f32 %v1435, %v1436
        %v1438 = vsel %vm532, %v1336, -inf
        %v1439 = vsel %vm532, %v1337, -inf
        %v1440 = vmax.f32 %v1438, %v1439
        %v1441 = vrot.slane %v1440, 4
        %v1442 = vmax.f32 %v1440, %v1441
        %v1443 = vrot.slane %v1442, 2
        %v1444 = vmax.f32 %v1442, %v1443
        %v1445 = vrot.slane %v1444, 1
        %v1446 = vmax.f32 %v1444, %v1445
        %v1447 = vsel %vm532, %v1338, -inf
        %v1448 = vsel %vm532, %v1339, -inf
        %v1449 = vmax.f32 %v1447, %v1448
        %v1450 = vrot.slane %v1449, 4
        %v1451 = vmax.f32 %v1449, %v1450
        %v1452 = vrot.slane %v1451, 2
        %v1453 = vmax.f32 %v1451, %v1452
        %v1454 = vrot.slane %v1453, 1
        %v1455 = vmax.f32 %v1453, %v1454
        %v1456 = vsel %vm532, %v1340, -inf
        %v1457 = vsel %vm532, %v1341, -inf
        %v1458 = vmax.f32 %v1456, %v1457
        %v1459 = vrot.slane %v1458, 4
        %v1460 = vmax.f32 %v1458, %v1459
        %v1461 = vrot.slane %v1460, 2
        %v1462 = vmax.f32 %v1460, %v1461
        %v1463 = vrot.slane %v1462, 1
        %v1464 = vmax.f32 %v1462, %v1463
        %v1465 = vsel %vm532, %v1342, -inf
        %v1466 = vsel %vm532, %v1343, -inf
        %v1467 = vmax.f32 %v1465, %v1466
        %v1468 = vrot.slane %v1467, 4
        %v1469 = vmax.f32 %v1467, %v1468
        %v1470 = vrot.slane %v1469, 2
        %v1471 = vmax.f32 %v1469, %v1470
        %v1472 = vrot.slane %v1471, 1
        %v1473 = vmax.f32 %v1471, %v1472
        %v1474 = vsel %vm532, %v1344, -inf
        %v1475 = vsel %vm532, %v1345, -inf
        %v1476 = vmax.f32 %v1474, %v1475
        %v1477 = vrot.slane %v1476, 4
        %v1478 = vmax.f32 %v1476, %v1477
        %v1479 = vrot.slane %v1478, 2
        %v1480 = vmax.f32 %v1478, %v1479
        %v1481 = vrot.slane %v1480, 1
        %v1482 = vmax.f32 %v1480, %v1481
        %v1483 = vsel %vm532, %v1346, -inf
        %v1484 = vsel %vm532, %v1347, -inf
        %v1485 = vmax.f32 %v1483, %v1484
        %v1486 = vrot.slane %v1485, 4
        %v1487 = vmax.f32 %v1485, %v1486
        %v1488 = vrot.slane %v1487, 2
        %v1489 = vmax.f32 %v1487, %v1488
        %v1490 = vrot.slane %v1489, 1
        %v1491 = vmax.f32 %v1489, %v1490
        %v1492 = vld [vmem:[%s278] sm:$0xff]
        %v1493 = vld [vmem:[%s278 + $0x8] sm:$0xff]
        %v1494 = vld [vmem:[%s278 + $0x10] sm:$0xff]
        %v1495 = vld [vmem:[%s278 + $0x18] sm:$0xff]
        %v1496 = vld [vmem:[%s278 + $0x20] sm:$0xff]
        %v1497 = vld [vmem:[%s278 + $0x28] sm:$0xff]
        %v1498 = vld [vmem:[%s278 + $0x30] sm:$0xff]
        %v1499 = vld [vmem:[%s278 + $0x38] sm:$0xff]
        %v1500 = vld [vmem:[%s278 + $0x40] sm:$0xff]
        %v1501 = vld [vmem:[%s278 + $0x48] sm:$0xff]
        %v1502 = vld [vmem:[%s278 + $0x50] sm:$0xff]
        %v1503 = vld [vmem:[%s278 + $0x58] sm:$0xff]
        %v1504 = vld [vmem:[%s278 + $0x60] sm:$0xff]
        %v1505 = vld [vmem:[%s278 + $0x68] sm:$0xff]
        %v1506 = vld [vmem:[%s278 + $0x70] sm:$0xff]
        %v1507 = vld [vmem:[%s278 + $0x78] sm:$0xff]
        %v1508 = vld [vmem:[%s278 + $0x80] sm:$0xff]
        %v1509 = vld [vmem:[%s278 + $0x88] sm:$0xff]
        %v1510 = vld [vmem:[%s278 + $0x90] sm:$0xff]
        %v1511 = vld [vmem:[%s278 + $0x98] sm:$0xff]
        %v1512 = vld [vmem:[%s278 + $0xa0] sm:$0xff]
        %v1513 = vld [vmem:[%s278 + $0xa8] sm:$0xff]
        %v1514 = vld [vmem:[%s278 + $0xb0] sm:$0xff]
        %v1515 = vld [vmem:[%s278 + $0xb8] sm:$0xff]
        %v1516 = vld [vmem:[%s278 + $0xc0] sm:$0xff]
        %v1517 = vld [vmem:[%s278 + $0xc8] sm:$0xff]
        %v1518 = vld [vmem:[%s278 + $0xd0] sm:$0xff]
        %v1519 = vld [vmem:[%s278 + $0xd8] sm:$0xff]
        %v1520 = vld [vmem:[%s278 + $0xe0] sm:$0xff]
        %v1521 = vld [vmem:[%s278 + $0xe8] sm:$0xff]
        %v1522 = vld [vmem:[%s278 + $0xf0] sm:$0xff]
        %v1523 = vld [vmem:[%s278 + $0xf8] sm:$0xff]
        %1525 = vset.pattern.permute.xlu0 0
        %1526 = vperm.xlu0 %1525, %v1492
        %v1527 = vpop.permute.xlu0 %1526
        %1530 = vset.pattern.permute.xlu0 0
        %1531 = vperm.xlu0 %1530, %v1493
        %v1532 = vpop.permute.xlu0 %1531
        %1535 = vset.pattern.permute.xlu0 0
        %1536 = vperm.xlu0 %1535, %v1494
        %v1537 = vpop.permute.xlu0 %1536
        %1540 = vset.pattern.permute.xlu0 0
        %1541 = vperm.xlu0 %1540, %v1495
        %v1542 = vpop.permute.xlu0 %1541
        %1545 = vset.pattern.permute.xlu0 0
        %1546 = vperm.xlu0 %1545, %v1496
        %v1547 = vpop.permute.xlu0 %1546
        %1550 = vset.pattern.permute.xlu0 0
        %1551 = vperm.xlu0 %1550, %v1497
        %v1552 = vpop.permute.xlu0 %1551
        %1555 = vset.pattern.permute.xlu0 0
        %1556 = vperm.xlu0 %1555, %v1498
        %v1557 = vpop.permute.xlu0 %1556
        %1560 = vset.pattern.permute.xlu0 0
        %1561 = vperm.xlu0 %1560, %v1499
        %v1562 = vpop.permute.xlu0 %1561
        %1565 = vset.pattern.permute.xlu0 0
        %1566 = vperm.xlu0 %1565, %v1500
        %v1567 = vpop.permute.xlu0 %1566
        %1570 = vset.pattern.permute.xlu0 0
        %1571 = vperm.xlu0 %1570, %v1501
        %v1572 = vpop.permute.xlu0 %1571
        %1575 = vset.pattern.permute.xlu0 0
        %1576 = vperm.xlu0 %1575, %v1502
        %v1577 = vpop.permute.xlu0 %1576
        %1580 = vset.pattern.permute.xlu0 0
        %1581 = vperm.xlu0 %1580, %v1503
        %v1582 = vpop.permute.xlu0 %1581
        %1585 = vset.pattern.permute.xlu0 0
        %1586 = vperm.xlu0 %1585, %v1504
        %v1587 = vpop.permute.xlu0 %1586
        %1590 = vset.pattern.permute.xlu0 0
        %1591 = vperm.xlu0 %1590, %v1505
        %v1592 = vpop.permute.xlu0 %1591
        %1595 = vset.pattern.permute.xlu0 0
        %1596 = vperm.xlu0 %1595, %v1506
        %v1597 = vpop.permute.xlu0 %1596
        %1600 = vset.pattern.permute.xlu0 0
        %1601 = vperm.xlu0 %1600, %v1507
        %v1602 = vpop.permute.xlu0 %1601
        %1605 = vset.pattern.permute.xlu0 0
        %1606 = vperm.xlu0 %1605, %v1508
        %v1607 = vpop.permute.xlu0 %1606
        %1610 = vset.pattern.permute.xlu0 0
        %1611 = vperm.xlu0 %1610, %v1509
        %v1612 = vpop.permute.xlu0 %1611
        %1615 = vset.pattern.permute.xlu0 0
        %1616 = vperm.xlu0 %1615, %v1510
        %v1617 = vpop.permute.xlu0 %1616
        %1620 = vset.pattern.permute.xlu0 0
        %1621 = vperm.xlu0 %1620, %v1511
        %v1622 = vpop.permute.xlu0 %1621
        %1625 = vset.pattern.permute.xlu0 0
        %1626 = vperm.xlu0 %1625, %v1512
        %v1627 = vpop.permute.xlu0 %1626
        %1630 = vset.pattern.permute.xlu0 0
        %1631 = vperm.xlu0 %1630, %v1513
        %v1632 = vpop.permute.xlu0 %1631
        %1635 = vset.pattern.permute.xlu0 0
        %1636 = vperm.xlu0 %1635, %v1514
        %v1637 = vpop.permute.xlu0 %1636
        %1640 = vset.pattern.permute.xlu0 0
        %1641 = vperm.xlu0 %1640, %v1515
        %v1642 = vpop.permute.xlu0 %1641
        %1645 = vset.pattern.permute.xlu0 0
        %1646 = vperm.xlu0 %1645, %v1516
        %v1647 = vpop.permute.xlu0 %1646
        %1650 = vset.pattern.permute.xlu0 0
        %1651 = vperm.xlu0 %1650, %v1517
        %v1652 = vpop.permute.xlu0 %1651
        %1655 = vset.pattern.permute.xlu0 0
        %1656 = vperm.xlu0 %1655, %v1518
        %v1657 = vpop.permute.xlu0 %1656
        %1660 = vset.pattern.permute.xlu0 0
        %1661 = vperm.xlu0 %1660, %v1519
        %v1662 = vpop.permute.xlu0 %1661
        %1665 = vset.pattern.permute.xlu0 0
        %1666 = vperm.xlu0 %1665, %v1520
        %v1667 = vpop.permute.xlu0 %1666
        %1670 = vset.pattern.permute.xlu0 0
        %1671 = vperm.xlu0 %1670, %v1521
        %v1672 = vpop.permute.xlu0 %1671
        %1675 = vset.pattern.permute.xlu0 0
        %1676 = vperm.xlu0 %1675, %v1522
        %v1677 = vpop.permute.xlu0 %1676
        %1680 = vset.pattern.permute.xlu0 0
        %1681 = vperm.xlu0 %1680, %v1523
        %v1682 = vpop.permute.xlu0 %1681
        %v1684 = vmul.f32 %v1316, %v1527
        %v1685 = vmul.f32 %v1317, %v1532
        %v1686 = vmul.f32 %v1318, %v1537
        %v1687 = vmul.f32 %v1319, %v1542
        %v1688 = vmul.f32 %v1320, %v1547
        %v1689 = vmul.f32 %v1321, %v1552
        %v1690 = vmul.f32 %v1322, %v1557
        %v1691 = vmul.f32 %v1323, %v1562
        %v1692 = vmul.f32 %v1324, %v1567
        %v1693 = vmul.f32 %v1325, %v1572
        %v1694 = vmul.f32 %v1326, %v1577
        %v1695 = vmul.f32 %v1327, %v1582
        %v1696 = vmul.f32 %v1328, %v1587
        %v1697 = vmul.f32 %v1329, %v1592
        %v1698 = vmul.f32 %v1330, %v1597
        %v1699 = vmul.f32 %v1331, %v1602
        %v1700 = vmul.f32 %v1332, %v1607
        %v1701 = vmul.f32 %v1333, %v1612
        %v1702 = vmul.f32 %v1334, %v1617
        %v1703 = vmul.f32 %v1335, %v1622
        %v1704 = vmul.f32 %v1336, %v1627
        %v1705 = vmul.f32 %v1337, %v1632
        %v1706 = vmul.f32 %v1338, %v1637
        %v1707 = vmul.f32 %v1339, %v1642
        %v1708 = vmul.f32 %v1340, %v1647
        %v1709 = vmul.f32 %v1341, %v1652
        %v1710 = vmul.f32 %v1342, %v1657
        %v1711 = vmul.f32 %v1343, %v1662
        %v1712 = vmul.f32 %v1344, %v1667
        %v1713 = vmul.f32 %v1345, %v1672
        %v1714 = vmul.f32 %v1346, %v1677
        %v1715 = vmul.f32 %v1347, %v1682
        %v1716 = vmul.f32 %v1356, %v1527
        %v1717 = vmul.f32 %v1356, %v1532
        %v1718 = vmul.f32 %v1365, %v1537
        %v1719 = vmul.f32 %v1365, %v1542
        %v1720 = vmul.f32 %v1374, %v1547
        %v1721 = vmul.f32 %v1374, %v1552
        %v1722 = vmul.f32 %v1383, %v1557
        %v1723 = vmul.f32 %v1383, %v1562
        %v1724 = vmul.f32 %v1392, %v1567
        %v1725 = vmul.f32 %v1392, %v1572
        %v1726 = vmul.f32 %v1401, %v1577
        %v1727 = vmul.f32 %v1401, %v1582
        %v1728 = vmul.f32 %v1410, %v1587
        %v1729 = vmul.f32 %v1410, %v1592
        %v1730 = vmul.f32 %v1419, %v1597
        %v1731 = vmul.f32 %v1419, %v1602
        %v1732 = vmul.f32 %v1428, %v1607
        %v1733 = vmul.f32 %v1428, %v1612
        %v1734 = vmul.f32 %v1437, %v1617
        %v1735 = vmul.f32 %v1437, %v1622
        %v1736 = vmul.f32 %v1446, %v1627
        %v1737 = vmul.f32 %v1446, %v1632
        %v1738 = vmul.f32 %v1455, %v1637
        %v1739 = vmul.f32 %v1455, %v1642
        %v1740 = vmul.f32 %v1464, %v1647
        %v1741 = vmul.f32 %v1464, %v1652
        %v1742 = vmul.f32 %v1473, %v1657
        %v1743 = vmul.f32 %v1473, %v1662
        %v1744 = vmul.f32 %v1482, %v1667
        %v1745 = vmul.f32 %v1482, %v1672
        %v1746 = vmul.f32 %v1491, %v1677
        %v1747 = vmul.f32 %v1491, %v1682
        %1780 = vrot.lane.b32.xlu0 %v1716, 64
        %v1781 = vpop.permute.xlu0 %1780
        %1782 = vrot.lane.b32.xlu0 %v1717, 64
        %v1783 = vpop.permute.xlu0 %1782
        %1784 = vrot.lane.b32.xlu0 %v1718, 64
        %v1785 = vpop.permute.xlu0 %1784
        %1786 = vrot.lane.b32.xlu0 %v1719, 64
        %v1787 = vpop.permute.xlu0 %1786
        %1788 = vrot.lane.b32.xlu0 %v1720, 64
        %v1789 = vpop.permute.xlu0 %1788
        %1790 = vrot.lane.b32.xlu0 %v1721, 64
        %v1791 = vpop.permute.xlu0 %1790
        %1792 = vrot.lane.b32.xlu0 %v1722, 64
        %v1793 = vpop.permute.xlu0 %1792
        %1794 = vrot.lane.b32.xlu0 %v1723, 64
        %v1795 = vpop.permute.xlu0 %1794
        %1796 = vrot.lane.b32.xlu0 %v1724, 64
        %v1797 = vpop.permute.xlu0 %1796
        %1798 = vrot.lane.b32.xlu0 %v1725, 64
        %v1799 = vpop.permute.xlu0 %1798
        %1800 = vrot.lane.b32.xlu0 %v1726, 64
        %v1801 = vpop.permute.xlu0 %1800
        %1802 = vrot.lane.b32.xlu0 %v1727, 64
        %v1803 = vpop.permute.xlu0 %1802
        %1804 = vrot.lane.b32.xlu0 %v1728, 64
        %v1805 = vpop.permute.xlu0 %1804
        %1806 = vrot.lane.b32.xlu0 %v1729, 64
        %v1807 = vpop.permute.xlu0 %1806
        %1808 = vrot.lane.b32.xlu0 %v1730, 64
        %v1809 = vpop.permute.xlu0 %1808
        %1810 = vrot.lane.b32.xlu0 %v1731, 64
        %v1811 = vpop.permute.xlu0 %1810
        %1812 = vrot.lane.b32.xlu0 %v1732, 64
        %v1813 = vpop.permute.xlu0 %1812
        %1814 = vrot.lane.b32.xlu0 %v1733, 64
        %v1815 = vpop.permute.xlu0 %1814
        %1816 = vrot.lane.b32.xlu0 %v1734, 64
        %v1817 = vpop.permute.xlu0 %1816
        %1818 = vrot.lane.b32.xlu0 %v1735, 64
        %v1819 = vpop.permute.xlu0 %1818
        %1820 = vrot.lane.b32.xlu0 %v1736, 64
        %v1821 = vpop.permute.xlu0 %1820
        %1822 = vrot.lane.b32.xlu0 %v1737, 64
        %v1823 = vpop.permute.xlu0 %1822
        %1824 = vrot.lane.b32.xlu0 %v1738, 64
        %v1825 = vpop.permute.xlu0 %1824
        %1826 = vrot.lane.b32.xlu0 %v1739, 64
        %v1827 = vpop.permute.xlu0 %1826
        %1828 = vrot.lane.b32.xlu0 %v1740, 64
        %v1829 = vpop.permute.xlu0 %1828
        %1830 = vrot.lane.b32.xlu0 %v1741, 64
        %v1831 = vpop.permute.xlu0 %1830
        %1832 = vrot.lane.b32.xlu0 %v1742, 64
        %v1833 = vpop.permute.xlu0 %1832
        %1834 = vrot.lane.b32.xlu0 %v1743, 64
        %v1835 = vpop.permute.xlu0 %1834
        %1836 = vrot.lane.b32.xlu0 %v1744, 64
        %v1837 = vpop.permute.xlu0 %1836
        %1838 = vrot.lane.b32.xlu0 %v1745, 64
        %v1839 = vpop.permute.xlu0 %1838
        %1840 = vrot.lane.b32.xlu0 %v1746, 64
        %v1841 = vpop.permute.xlu0 %1840
        %1842 = vrot.lane.b32.xlu0 %v1747, 64
        %v1843 = vpop.permute.xlu0 %1842
        %v1876 = vsel %vm532, %v1684, %v1781
        %v1877 = vsel %vm532, %v1685, %v1783
        %v1878 = vsel %vm532, %v1686, %v1785
        %v1879 = vsel %vm532, %v1687, %v1787
        %v1880 = vsel %vm532, %v1688, %v1789
        %v1881 = vsel %vm532, %v1689, %v1791
        %v1882 = vsel %vm532, %v1690, %v1793
        %v1883 = vsel %vm532, %v1691, %v1795
        %v1884 = vsel %vm532, %v1692, %v1797
        %v1885 = vsel %vm532, %v1693, %v1799
        %v1886 = vsel %vm532, %v1694, %v1801
        %v1887 = vsel %vm532, %v1695, %v1803
        %v1888 = vsel %vm532, %v1696, %v1805
        %v1889 = vsel %vm532, %v1697, %v1807
        %v1890 = vsel %vm532, %v1698, %v1809
        %v1891 = vsel %vm532, %v1699, %v1811
        %v1892 = vsel %vm532, %v1700, %v1813
        %v1893 = vsel %vm532, %v1701, %v1815
        %v1894 = vsel %vm532, %v1702, %v1817
        %v1895 = vsel %vm532, %v1703, %v1819
        %v1896 = vsel %vm532, %v1704, %v1821
        %v1897 = vsel %vm532, %v1705, %v1823
        %v1898 = vsel %vm532, %v1706, %v1825
        %v1899 = vsel %vm532, %v1707, %v1827
        %v1900 = vsel %vm532, %v1708, %v1829
        %v1901 = vsel %vm532, %v1709, %v1831
        %v1902 = vsel %vm532, %v1710, %v1833
        %v1903 = vsel %vm532, %v1711, %v1835
        %v1904 = vsel %vm532, %v1712, %v1837
        %v1905 = vsel %vm532, %v1713, %v1839
        %v1906 = vsel %vm532, %v1714, %v1841
        %v1907 = vsel %vm532, %v1715, %v1843
        %1908 = vst [vmem:[%s265] sm:$0xff] %v1876
        %1909 = vst [vmem:[%s265 + $0x8] sm:$0xff] %v1877
        %1910 = vst [vmem:[%s265 + $0x10] sm:$0xff] %v1878
        %1911 = vst [vmem:[%s265 + $0x18] sm:$0xff] %v1879
        %1912 = vst [vmem:[%s265 + $0x20] sm:$0xff] %v1880
        %1913 = vst [vmem:[%s265 + $0x28] sm:$0xff] %v1881
        %1914 = vst [vmem:[%s265 + $0x30] sm:$0xff] %v1882
        %1915 = vst [vmem:[%s265 + $0x38] sm:$0xff] %v1883
        %1916 = vst [vmem:[%s265 + $0x40] sm:$0xff] %v1884
        %1917 = vst [vmem:[%s265 + $0x48] sm:$0xff] %v1885
        %1918 = vst [vmem:[%s265 + $0x50] sm:$0xff] %v1886
        %1919 = vst [vmem:[%s265 + $0x58] sm:$0xff] %v1887
        %1920 = vst [vmem:[%s265 + $0x60] sm:$0xff] %v1888
        %1921 = vst [vmem:[%s265 + $0x68] sm:$0xff] %v1889
        %1922 = vst [vmem:[%s265 + $0x70] sm:$0xff] %v1890
        %1923 = vst [vmem:[%s265 + $0x78] sm:$0xff] %v1891
        %1924 = vst [vmem:[%s265 + $0x80] sm:$0xff] %v1892
        %1925 = vst [vmem:[%s265 + $0x88] sm:$0xff] %v1893
        %1926 = vst [vmem:[%s265 + $0x90] sm:$0xff] %v1894
        %1927 = vst [vmem:[%s265 + $0x98] sm:$0xff] %v1895
        %1928 = vst [vmem:[%s265 + $0xa0] sm:$0xff] %v1896
        %1929 = vst [vmem:[%s265 + $0xa8] sm:$0xff] %v1897
        %1930 = vst [vmem:[%s265 + $0xb0] sm:$0xff] %v1898
        %1931 = vst [vmem:[%s265 + $0xb8] sm:$0xff] %v1899
        %1932 = vst [vmem:[%s265 + $0xc0] sm:$0xff] %v1900
        %1933 = vst [vmem:[%s265 + $0xc8] sm:$0xff] %v1901
        %1934 = vst [vmem:[%s265 + $0xd0] sm:$0xff] %v1902
        %1935 = vst [vmem:[%s265 + $0xd8] sm:$0xff] %v1903
        %1936 = vst [vmem:[%s265 + $0xe0] sm:$0xff] %v1904
        %1937 = vst [vmem:[%s265 + $0xe8] sm:$0xff] %v1905
        %1938 = vst [vmem:[%s265 + $0xf0] sm:$0xff] %v1906
        %1939 = vst [vmem:[%s265 + $0xf8] sm:$0xff] %v1907
        %s1940 = sand.u32 %s164, 1
        %s1941 = scalar_lea.sflag [#allocation3], %s1940
        %s1942 = sand.u32 %s164, 1
        %s1943 = smul.addr %s1942, 256
        %s1944 = scalar_lea.vmem [#allocation2], %s1943
        // Predicated region
        $region45: #{tpu_custom_call.1} parent=43 // pred_check
          %p1945 = pneg %p174
        $region46: #{tpu_custom_call.1} parent=43 // pred_check_branch
          %1947 = sbr.rel (%p1945) target = $region48
        $region47: #{tpu_custom_call.1} parent=43 // pred_region
          %s1948 = smul.u32 16, %s20
          %1950 = vsyncadd %s1941, 0
          %s1951 = smul.addr %s1948, 2
          %s1952 = smul.addr %s1951, 8
          %s1953 = scalar_lea.hbm %s6, %s1952
          %s1954 = sshll.u32 %s1944, 4
          %s1955 = int_to_ptr.vmem [resolvable:$true] %s1954
          %s1956 = sshll.u32 %s1953, 4
          %s1957 = int_to_ptr.hbm [resolvable:$true] %s1956
          %1962 = dma.vmem_to_hbm [thread:$0]  %s1955, 4096, %s1957, %s1941, 128, 128, 8
        $region48: #{tpu_custom_call.1} parent=43 // pred_fallthru
          _
      $region44: #{tpu_custom_call.1} parent=5 // pred_fallthru
        _
      %p1963 = scmp.le.s32.totalorder 2, %s15
      // Predicated region
      $region49: #{tpu_custom_call.1} parent=5 // pred_check
        %p1964 = pneg %p1963
      $region50: #{tpu_custom_call.1} parent=5 // pred_check_branch
        %1966 = sbr.rel (%p1964) target = $region52
      $region51: #{tpu_custom_call.1} parent=5 // pred_region
        %s1967 = ssub.s32 %s15, 2
        // Predicated region
        $region53: #{tpu_custom_call.1} parent=51 // pred_check
          %p1968 = pneg %p180
        $region54: #{tpu_custom_call.1} parent=51 // pred_check_branch
          %1970 = sbr.rel (%p1968) target = $region56
        $region55: #{tpu_custom_call.1} parent=51 // pred_region
          %s1971 = sand.u32 %s165, 1
          %s1972 = scalar_lea.sflag [#allocation3], %s1971
          %s1973 = sand.u32 %s165, 1
          %s1974 = smul.addr %s1973, 256
          %s1975 = scalar_lea.vmem [#allocation2], %s1974
          %1977 = dma.done %s1972, 4096
        $region56: #{tpu_custom_call.1} parent=51 // pred_fallthru
          _
      $region52: #{tpu_custom_call.1} parent=5 // pred_fallthru
        _
    $region6: #{tpu_custom_call.1} parent=1 // loop_footer
      %s19 = sadd.s32 1, %s15
    $region7: #{tpu_custom_call.1} parent=1 // loop_footer_branch
      %14 = sbr.rel target = $region3
    $region8: #{tpu_custom_call.1} parent=1 // loop_exit
      _
    %1978 = vsyncpa [#allocation3], 1
    %s1979 = scalar_lea.sflag [#allocation3], 1
    %1980 = vsyncpa %s1979, 1

</llo_original>
